<compile_context>
chip_gen: v6e
topology: v6e:2x2x1
jax: 0.10.0
libtpu: 0.0.40
codegen_flags: <defaults>
</compile_context>

<pallas_src>
import jax
import jax.numpy as jnp
from jax.experimental import pallas as pl
from jax.experimental.pallas import tpu as pltpu


def _round_up(x, m):
    return (x + m - 1) // m * m


# --------------------------------------------------------------------------
# Pass 1: conv (8 fused bf16 matmuls) + per-channel sum / sum-of-squares.
#   xm_ref : (TOH, 2, OW+1, 2*Cin)  main input row-slabs for this tile (bf16)
#   xh_ref : (1,   2, OW+1, 2*Cin)  one halo slab below the tile (bf16)
#   w_ref  : (4, 2, 2*Cin, Cout_p)  reorganized conv weights (bf16)
#   y_ref  : (TOH*OW, Cout_p)       conv output tile (f32, HBM intermediate)
#   stats  : (2, Cout_p)            [sum(y); sum(y*y)]  accumulated over grid
# --------------------------------------------------------------------------
def _conv_stats_kernel(xm_ref, xh_ref, w_ref, y_ref, stats_ref):
    toh = xm_ref.shape[0]
    ow1 = xm_ref.shape[2]
    ow = ow1 - 1
    c2 = xm_ref.shape[3]
    cout_p = y_ref.shape[-1]
    mtile = toh * ow

    # main rows + 1-slab halo -> (toh + 1, 2, OW+1, 2*Cin)
    xfull = jnp.concatenate([xm_ref[...], xh_ref[...]], axis=0)

    acc = jnp.zeros((mtile, cout_p), jnp.float32)
    for kh in range(4):            # kernel row  = 2*s + p
        s, p = divmod(kh, 2)
        rows = xfull[s:s + toh, p]                       # (toh, OW+1, 2*Cin)
        for cs in range(2):        # kernel cols 2*cs and 2*cs+1 folded into 2*Cin
            xin = rows[:, cs:cs + ow, :].reshape(mtile, c2)
            acc = acc + jnp.dot(xin, w_ref[kh, cs],
                                preferred_element_type=jnp.float32)

    y_ref[...] = acc

    # Single pass over the tile: per-channel sum and sum of squares (f32).
    ch_sum = jnp.sum(acc, axis=0, keepdims=True)          # (1, Cout_p)
    ch_sq = jnp.sum(acc * acc, axis=0, keepdims=True)     # (1, Cout_p)
    tile_stats = jnp.concatenate([ch_sum, ch_sq], axis=0)  # (2, Cout_p)

    @pl.when(jnp.logical_and(pl.program_id(0) == 0, pl.program_id(1) == 0))
    def _():
        stats_ref[...] = jnp.zeros_like(stats_ref)

    stats_ref[...] += tile_stats


# --------------------------------------------------------------------------
# Pass 2: y * scale + shift, then LeakyReLU(0.2).  Pure elementwise, tiled over
# M with 'parallel' semantics (megacore sharding on v7x).
# --------------------------------------------------------------------------
def _bn_lrelu_kernel(y_ref, scale_ref, shift_ref, o_ref):
    yhat = y_ref[...] * scale_ref[...] + shift_ref[...]
    o_ref[...] = jnp.where(yhat >= 0, yhat, jnp.float32(0.2) * yhat)


# --------------------------------------------------------------------------
# Tiling helpers (all static, trace-time Python).
# --------------------------------------------------------------------------
def _choose_row_block(oh, ow, c2, cout_p, budget_bytes=6 * 1024 * 1024):
    """Largest divisor of OH whose input + y tiles fit a per-buffer budget."""
    best = 1
    for t in range(1, oh + 1):
        if oh % t:
            continue
        in_bytes = t * 2 * (ow + 1) * c2 * 2      # bf16 input tile
        y_bytes = t * ow * cout_p * 4             # f32 conv-output tile
        if in_bytes + y_bytes <= budget_bytes:
            best = t
    return best


def _pick_row_tile(m, target=2048):
    """Divisor of M that is a multiple of 8 (or M itself), at most `target`."""
    for d in range(min(m, target), 0, -1):
        if m % d == 0 and (d % 8 == 0 or d == m):
            return d
    return m


# --------------------------------------------------------------------------
# Wrapper: layout glue (NCHW<->NHWC, pad, pure reshapes) + two pallas_calls.
# --------------------------------------------------------------------------
def unet_encoder_block(x, w, gamma, beta, eps=1e-5):
    """x: (N, Cin, H, W) f32.  w: (Cout, Cin, 4, 4) OIHW.  gamma/beta: (Cout,).
    Returns (N, Cout, H//2, W//2) f32."""
    N, Cin, H, W = x.shape
    Cout = w.shape[0]
    assert w.shape == (Cout, Cin, 4, 4)
    assert H % 2 == 0 and W % 2 == 0
    OH, OW = H // 2, W // 2
    M = N * OH * OW
    C2 = 2 * Cin
    Cout_p = _round_up(Cout, 128)              # lane-dense output channels

    # ---- glue: NCHW -> NHWC, pad=1, bf16, then a pure-reshape 2x2 phase split.
    # xr[n, i, p, j, q*Cin + c] == x_pad[n, 2*i + p, 2*j + q, c]
    x_nhwc = jnp.transpose(x, (0, 2, 3, 1))
    x_pad = jnp.pad(x_nhwc, ((0, 0), (1, 1), (1, 1), (0, 0))).astype(jnp.bfloat16)
    xr = x_pad.reshape(N, OH + 1, 2, OW + 1, C2)

    # weights: (Cout, Cin, kh, kw) -> w2[kh, cs, q*Cin + c, o] = W[o, c, kh, 2*cs + q]
    wt = jnp.transpose(w, (2, 3, 1, 0))                       # (4, 4, Cin, Cout)
    w2 = wt.reshape(4, 2, 2, Cin, Cout).reshape(4, 2, C2, Cout)
    w2 = jnp.pad(w2, ((0, 0), (0, 0), (0, 0), (0, Cout_p - Cout))).astype(jnp.bfloat16)

    TOH = _choose_row_block(OH, OW, C2, Cout_p)   # output rows per pass-1 tile
    NRB = OH // TOH                               # row blocks per image
    MT = TOH * OW                                 # conv-output rows per tile

    y3, stats = pl.pallas_call(
        _conv_stats_kernel,
        grid=(N, NRB),
        in_specs=[
            # main row-slabs [i*TOH, i*TOH + TOH)
            pl.BlockSpec((None, TOH, 2, OW + 1, C2),
                         lambda n, i: (n, i, 0, 0, 0)),
            # one halo slab at (i+1)*TOH (k=4 s=2 needs one extra slab below)
            pl.BlockSpec((None, 1, 2, OW + 1, C2),
                         lambda n, i: (n, (i + 1) * TOH, 0, 0, 0)),
            # full (small) weight tensor, resident across the grid
            pl.BlockSpec((4, 2, C2, Cout_p), lambda n, i: (0, 0, 0, 0)),
        ],
        out_specs=[
            pl.BlockSpec((None, MT, Cout_p), lambda n, i: (n * NRB + i, 0, 0)),
            pl.BlockSpec((2, Cout_p), lambda n, i: (0, 0)),   # resident accumulator
        ],
        out_shape=[
            jax.ShapeDtypeStruct((N * NRB, MT, Cout_p), jnp.float32),
            jax.ShapeDtypeStruct((2, Cout_p), jnp.float32),
        ],
        compiler_params=pltpu.CompilerParams(
            dimension_semantics=("arbitrary", "arbitrary"),
            vmem_limit_bytes=48 * 1024 * 1024),
    )(xr, xr, w2)

    # ---- O(Cout) glue: finalize BN batch stats into per-channel scale/shift.
    s1 = stats[0, :Cout]
    s2 = stats[1, :Cout]
    mean = s1 / M
    var = s2 / M - mean * mean                     # biased var (BN training norm)
    inv_std = jax.lax.rsqrt(var + jnp.float32(eps))
    scale = gamma.astype(jnp.float32) * inv_std
    shift = beta.astype(jnp.float32) - mean * scale
    scale_p = jnp.pad(scale, (0, Cout_p - Cout)).reshape(1, Cout_p)
    shift_p = jnp.pad(shift, (0, Cout_p - Cout)).reshape(1, Cout_p)

    y2d = y3.reshape(M, Cout_p)                    # pure reshape, (n, oh, ow) order
    TM = _pick_row_tile(M)

    out2d = pl.pallas_call(
        _bn_lrelu_kernel,
        grid=(M // TM,),
        in_specs=[
            pl.BlockSpec((TM, Cout_p), lambda i: (i, 0)),
            pl.BlockSpec((1, Cout_p), lambda i: (0, 0)),
            pl.BlockSpec((1, Cout_p), lambda i: (0, 0)),
        ],
        out_specs=pl.BlockSpec((TM, Cout_p), lambda i: (i, 0)),
        out_shape=jax.ShapeDtypeStruct((M, Cout_p), jnp.float32),
        compiler_params=pltpu.CompilerParams(
            dimension_semantics=("parallel",)),
    )(y2d, scale_p, shift_p)

    out = out2d[:, :Cout].reshape(N, OH, OW, Cout)
    return jnp.transpose(out, (0, 3, 1, 2))        # back to NCHW


# --------------------------------------------------------------------------
# Pure-JAX reference matching the PyTorch forward (f32 everywhere).
# --------------------------------------------------------------------------
def _reference(x, w, gamma, beta, eps=1e-5):
    y = jax.lax.conv_general_dilated(
        x, w, window_strides=(2, 2), padding=((1, 1), (1, 1)),
        dimension_numbers=("NCHW", "OIHW", "NCHW"))
    mean = jnp.mean(y, axis=(0, 2, 3), keepdims=True)
    var = jnp.mean((y - mean) ** 2, axis=(0, 2, 3), keepdims=True)
    yhat = (y - mean) * jax.lax.rsqrt(var + eps)
    yhat = yhat * gamma.reshape(1, -1, 1, 1) + beta.reshape(1, -1, 1, 1)
    return jnp.where(yhat >= 0, yhat, 0.2 * yhat)


if __name__ == "__main__":
    key = jax.random.PRNGKey(0)
    kx, kw, kg, kb = jax.random.split(key, 4)

    N, Cin, H, W = 2, 4, 16, 16
    Cout = 8

    x = jax.random.normal(kx, (N, Cin, H, W), dtype=jnp.float32)
    # Conv2d(4->8, k=4, s=2, p=1, bias=False) -- bias off since norm is BatchNorm2d.
    w = jax.random.normal(kw, (Cout, Cin, 4, 4), dtype=jnp.float32) * 0.1
    gamma = 1.0 + 0.1 * jax.random.normal(kg, (Cout,), dtype=jnp.float32)
    beta = 0.1 * jax.random.normal(kb, (Cout,), dtype=jnp.float32)

    fwd = jax.jit(unet_encoder_block)
    out = jax.block_until_ready(fwd(x, w, gamma, beta))
    assert out.shape == (N, Cout, H // 2, W // 2), out.shape

    # Tight check: same math with bf16-rounded conv inputs (MXU computes exact
    # bf16 x bf16 products with f32 accumulation), BN/LeakyReLU in f32.
    x_q = x.astype(jnp.bfloat16).astype(jnp.float32)
    w_q = w.astype(jnp.bfloat16).astype(jnp.float32)
    ref_q = jax.block_until_ready(_reference(x_q, w_q, gamma, beta))
    err_q = float(jnp.max(jnp.abs(out - ref_q)))
    assert jnp.allclose(out, ref_q, atol=2e-3, rtol=2e-3), err_q

    # Loose check against the full-f32 PyTorch-equivalent forward (bf16 matmul
    # inputs change results at the ~1e-3 level, per design).
    ref = jax.block_until_ready(_reference(x, w, gamma, beta))
    err = float(jnp.max(jnp.abs(out - ref)))
    assert jnp.allclose(out, ref, atol=5e-2, rtol=5e-2), err

    print("KERNEL_OK")
</pallas_src>

<mosaic_0001>
module attributes {stable_mosaic.version = 11 : i64} {
  func.func @_conv_stats_kernel(%arg0: i32, %arg1: i32, %arg2: memref<1x8x2x9x8xbf16, #tpu.memory_space<vmem>>, %arg3: memref<1x1x2x9x8xbf16, #tpu.memory_space<vmem>>, %arg4: memref<4x2x8x128xbf16, #tpu.memory_space<vmem>>, %arg5: memref<1x64x128xf32, #tpu.memory_space<vmem>>, %arg6: memref<2x128xf32, #tpu.memory_space<vmem>>) attributes {dimension_semantics = [#tpu.dimension_semantics<arbitrary>, #tpu.dimension_semantics<arbitrary>], iteration_bounds = array<i64: 2, 1>, scalar_prefetch = 0 : i64, scratch_operands = 0 : i64, tpu.core_type = #tpu.core_type<tc>, window_params = [{transform_indices = @transform_0, window_bounds = array<i64: 1, 8, 2, 9, 8>}, {transform_indices = @transform_1, window_bounds = array<i64: 1, 1, 2, 9, 8>}, {pipeline_mode = #tpu.pipeline_mode<synchronous>, transform_indices = @transform_2, window_bounds = array<i64: 4, 2, 8, 128>}, {transform_indices = @transform_3, window_bounds = array<i64: 1, 64, 128>}, {pipeline_mode = #tpu.pipeline_mode<synchronous>, transform_indices = @transform_4, window_bounds = array<i64: 2, 128>}]} {
    %c0 = arith.constant 0 : index
    %c0_0 = arith.constant 0 : index
    %c0_1 = arith.constant 0 : index
    %c0_2 = arith.constant 0 : index
    %c0_3 = arith.constant 0 : index
    %0 = vector.load %arg2[%c0, %c0_0, %c0_1, %c0_2, %c0_3] : memref<1x8x2x9x8xbf16, #tpu.memory_space<vmem>>, vector<1x8x2x9x8xbf16>
    %1 = vector.shape_cast %0 : vector<1x8x2x9x8xbf16> to vector<8x2x9x8xbf16>
    %c0_4 = arith.constant 0 : index
    %c0_5 = arith.constant 0 : index
    %c0_6 = arith.constant 0 : index
    %c0_7 = arith.constant 0 : index
    %c0_8 = arith.constant 0 : index
    %2 = vector.load %arg3[%c0_4, %c0_5, %c0_6, %c0_7, %c0_8] : memref<1x1x2x9x8xbf16, #tpu.memory_space<vmem>>, vector<1x1x2x9x8xbf16>
    %3 = vector.shape_cast %2 : vector<1x1x2x9x8xbf16> to vector<1x2x9x8xbf16>
    %4 = tpu.concatenate %1, %3 in 0 : vector<8x2x9x8xbf16>, vector<1x2x9x8xbf16> -> vector<9x2x9x8xbf16>
    %cst = arith.constant 0.000000e+00 : f32
    %5 = vector.broadcast %cst : f32 to vector<64x128xf32>
    %6 = vector.extract_strided_slice %4 {offsets = [0, 0, 0, 0], sizes = [8, 1, 9, 8], strides = [1, 1, 1, 1]} : vector<9x2x9x8xbf16> to vector<8x1x9x8xbf16>
    %7 = vector.shape_cast %6 : vector<8x1x9x8xbf16> to vector<8x9x8xbf16>
    %8 = vector.extract_strided_slice %7 {offsets = [0, 0, 0], sizes = [8, 8, 8], strides = [1, 1, 1]} : vector<8x9x8xbf16> to vector<8x8x8xbf16>
    %9 = vector.shape_cast %8 : vector<8x8x8xbf16> to vector<64x8xbf16>
    %c0_9 = arith.constant 0 : index
    %c0_10 = arith.constant 0 : index
    %c0_11 = arith.constant 0 : index
    %c0_12 = arith.constant 0 : index
    %10 = vector.load %arg4[%c0_9, %c0_10, %c0_11, %c0_12] : memref<4x2x8x128xbf16, #tpu.memory_space<vmem>>, vector<1x1x8x128xbf16>
    %11 = vector.shape_cast %10 : vector<1x1x8x128xbf16> to vector<8x128xbf16>
    %cst_13 = arith.constant dense<0.000000e+00> : vector<64x128xf32>
    %12 = tpu.matmul %9, %11, %cst_13 {dimension_numbers = #tpu.dot_dimension_numbers<[1], [0], [0], [1], [0, 0, 1, 1], [], []>} : vector<64x8xbf16>, vector<8x128xbf16>, vector<64x128xf32> -> vector<64x128xf32>
    %13 = arith.addf %5, %12 : vector<64x128xf32>
    %14 = vector.extract_strided_slice %7 {offsets = [0, 1, 0], sizes = [8, 8, 8], strides = [1, 1, 1]} : vector<8x9x8xbf16> to vector<8x8x8xbf16>
    %15 = vector.shape_cast %14 : vector<8x8x8xbf16> to vector<64x8xbf16>
    %c0_14 = arith.constant 0 : index
    %c1 = arith.constant 1 : index
    %c0_15 = arith.constant 0 : index
    %c0_16 = arith.constant 0 : index
    %16 = vector.load %arg4[%c0_14, %c1, %c0_15, %c0_16] : memref<4x2x8x128xbf16, #tpu.memory_space<vmem>>, vector<1x1x8x128xbf16>
    %17 = vector.shape_cast %16 : vector<1x1x8x128xbf16> to vector<8x128xbf16>
    %cst_17 = arith.constant dense<0.000000e+00> : vector<64x128xf32>
    %18 = tpu.matmul %15, %17, %cst_17 {dimension_numbers = #tpu.dot_dimension_numbers<[1], [0], [0], [1], [0, 0, 1, 1], [], []>} : vector<64x8xbf16>, vector<8x128xbf16>, vector<64x128xf32> -> vector<64x128xf32>
    %19 = arith.addf %13, %18 : vector<64x128xf32>
    %20 = vector.extract_strided_slice %4 {offsets = [0, 1, 0, 0], sizes = [8, 1, 9, 8], strides = [1, 1, 1, 1]} : vector<9x2x9x8xbf16> to vector<8x1x9x8xbf16>
    %21 = vector.shape_cast %20 : vector<8x1x9x8xbf16> to vector<8x9x8xbf16>
    %22 = vector.extract_strided_slice %21 {offsets = [0, 0, 0], sizes = [8, 8, 8], strides = [1, 1, 1]} : vector<8x9x8xbf16> to vector<8x8x8xbf16>
    %23 = vector.shape_cast %22 : vector<8x8x8xbf16> to vector<64x8xbf16>
    %c1_18 = arith.constant 1 : index
    %c0_19 = arith.constant 0 : index
    %c0_20 = arith.constant 0 : index
    %c0_21 = arith.constant 0 : index
    %24 = vector.load %arg4[%c1_18, %c0_19, %c0_20, %c0_21] : memref<4x2x8x128xbf16, #tpu.memory_space<vmem>>, vector<1x1x8x128xbf16>
    %25 = vector.shape_cast %24 : vector<1x1x8x128xbf16> to vector<8x128xbf16>
    %cst_22 = arith.constant dense<0.000000e+00> : vector<64x128xf32>
    %26 = tpu.matmul %23, %25, %cst_22 {dimension_numbers = #tpu.dot_dimension_numbers<[1], [0], [0], [1], [0, 0, 1, 1], [], []>} : vector<64x8xbf16>, vector<8x128xbf16>, vector<64x128xf32> -> vector<64x128xf32>
    %27 = arith.addf %19, %26 : vector<64x128xf32>
    %28 = vector.extract_strided_slice %21 {offsets = [0, 1, 0], sizes = [8, 8, 8], strides = [1, 1, 1]} : vector<8x9x8xbf16> to vector<8x8x8xbf16>
    %29 = vector.shape_cast %28 : vector<8x8x8xbf16> to vector<64x8xbf16>
    %c1_23 = arith.constant 1 : index
    %c1_24 = arith.constant 1 : index
    %c0_25 = arith.constant 0 : index
    %c0_26 = arith.constant 0 : index
    %30 = vector.load %arg4[%c1_23, %c1_24, %c0_25, %c0_26] : memref<4x2x8x128xbf16, #tpu.memory_space<vmem>>, vector<1x1x8x128xbf16>
    %31 = vector.shape_cast %30 : vector<1x1x8x128xbf16> to vector<8x128xbf16>
    %cst_27 = arith.constant dense<0.000000e+00> : vector<64x128xf32>
    %32 = tpu.matmul %29, %31, %cst_27 {dimension_numbers = #tpu.dot_dimension_numbers<[1], [0], [0], [1], [0, 0, 1, 1], [], []>} : vector<64x8xbf16>, vector<8x128xbf16>, vector<64x128xf32> -> vector<64x128xf32>
    %33 = arith.addf %27, %32 : vector<64x128xf32>
    %34 = vector.extract_strided_slice %4 {offsets = [1, 0, 0, 0], sizes = [8, 1, 9, 8], strides = [1, 1, 1, 1]} : vector<9x2x9x8xbf16> to vector<8x1x9x8xbf16>
    %35 = vector.shape_cast %34 : vector<8x1x9x8xbf16> to vector<8x9x8xbf16>
    %36 = vector.extract_strided_slice %35 {offsets = [0, 0, 0], sizes = [8, 8, 8], strides = [1, 1, 1]} : vector<8x9x8xbf16> to vector<8x8x8xbf16>
    %37 = vector.shape_cast %36 : vector<8x8x8xbf16> to vector<64x8xbf16>
    %c2 = arith.constant 2 : index
    %c0_28 = arith.constant 0 : index
    %c0_29 = arith.constant 0 : index
    %c0_30 = arith.constant 0 : index
    %38 = vector.load %arg4[%c2, %c0_28, %c0_29, %c0_30] : memref<4x2x8x128xbf16, #tpu.memory_space<vmem>>, vector<1x1x8x128xbf16>
    %39 = vector.shape_cast %38 : vector<1x1x8x128xbf16> to vector<8x128xbf16>
    %cst_31 = arith.constant dense<0.000000e+00> : vector<64x128xf32>
    %40 = tpu.matmul %37, %39, %cst_31 {dimension_numbers = #tpu.dot_dimension_numbers<[1], [0], [0], [1], [0, 0, 1, 1], [], []>} : vector<64x8xbf16>, vector<8x128xbf16>, vector<64x128xf32> -> vector<64x128xf32>
    %41 = arith.addf %33, %40 : vector<64x128xf32>
    %42 = vector.extract_strided_slice %35 {offsets = [0, 1, 0], sizes = [8, 8, 8], strides = [1, 1, 1]} : vector<8x9x8xbf16> to vector<8x8x8xbf16>
    %43 = vector.shape_cast %42 : vector<8x8x8xbf16> to vector<64x8xbf16>
    %c2_32 = arith.constant 2 : index
    %c1_33 = arith.constant 1 : index
    %c0_34 = arith.constant 0 : index
    %c0_35 = arith.constant 0 : index
    %44 = vector.load %arg4[%c2_32, %c1_33, %c0_34, %c0_35] : memref<4x2x8x128xbf16, #tpu.memory_space<vmem>>, vector<1x1x8x128xbf16>
    %45 = vector.shape_cast %44 : vector<1x1x8x128xbf16> to vector<8x128xbf16>
    %cst_36 = arith.constant dense<0.000000e+00> : vector<64x128xf32>
    %46 = tpu.matmul %43, %45, %cst_36 {dimension_numbers = #tpu.dot_dimension_numbers<[1], [0], [0], [1], [0, 0, 1, 1], [], []>} : vector<64x8xbf16>, vector<8x128xbf16>, vector<64x128xf32> -> vector<64x128xf32>
    %47 = arith.addf %41, %46 : vector<64x128xf32>
    %48 = vector.extract_strided_slice %4 {offsets = [1, 1, 0, 0], sizes = [8, 1, 9, 8], strides = [1, 1, 1, 1]} : vector<9x2x9x8xbf16> to vector<8x1x9x8xbf16>
    %49 = vector.shape_cast %48 : vector<8x1x9x8xbf16> to vector<8x9x8xbf16>
    %50 = vector.extract_strided_slice %49 {offsets = [0, 0, 0], sizes = [8, 8, 8], strides = [1, 1, 1]} : vector<8x9x8xbf16> to vector<8x8x8xbf16>
    %51 = vector.shape_cast %50 : vector<8x8x8xbf16> to vector<64x8xbf16>
    %c3 = arith.constant 3 : index
    %c0_37 = arith.constant 0 : index
    %c0_38 = arith.constant 0 : index
    %c0_39 = arith.constant 0 : index
    %52 = vector.load %arg4[%c3, %c0_37, %c0_38, %c0_39] : memref<4x2x8x128xbf16, #tpu.memory_space<vmem>>, vector<1x1x8x128xbf16>
    %53 = vector.shape_cast %52 : vector<1x1x8x128xbf16> to vector<8x128xbf16>
    %cst_40 = arith.constant dense<0.000000e+00> : vector<64x128xf32>
    %54 = tpu.matmul %51, %53, %cst_40 {dimension_numbers = #tpu.dot_dimension_numbers<[1], [0], [0], [1], [0, 0, 1, 1], [], []>} : vector<64x8xbf16>, vector<8x128xbf16>, vector<64x128xf32> -> vector<64x128xf32>
    %55 = arith.addf %47, %54 : vector<64x128xf32>
    %56 = vector.extract_strided_slice %49 {offsets = [0, 1, 0], sizes = [8, 8, 8], strides = [1, 1, 1]} : vector<8x9x8xbf16> to vector<8x8x8xbf16>
    %57 = vector.shape_cast %56 : vector<8x8x8xbf16> to vector<64x8xbf16>
    %c3_41 = arith.constant 3 : index
    %c1_42 = arith.constant 1 : index
    %c0_43 = arith.constant 0 : index
    %c0_44 = arith.constant 0 : index
    %58 = vector.load %arg4[%c3_41, %c1_42, %c0_43, %c0_44] : memref<4x2x8x128xbf16, #tpu.memory_space<vmem>>, vector<1x1x8x128xbf16>
    %59 = vector.shape_cast %58 : vector<1x1x8x128xbf16> to vector<8x128xbf16>
    %cst_45 = arith.constant dense<0.000000e+00> : vector<64x128xf32>
    %60 = tpu.matmul %57, %59, %cst_45 {dimension_numbers = #tpu.dot_dimension_numbers<[1], [0], [0], [1], [0, 0, 1, 1], [], []>} : vector<64x8xbf16>, vector<8x128xbf16>, vector<64x128xf32> -> vector<64x128xf32>
    %61 = arith.addf %55, %60 : vector<64x128xf32>
    %c0_46 = arith.constant 0 : index
    %c0_47 = arith.constant 0 : index
    %c0_48 = arith.constant 0 : index
    %62 = vector.load %arg5[%c0_46, %c0_47, %c0_48] : memref<1x64x128xf32, #tpu.memory_space<vmem>>, vector<1x64x128xf32>
    %63 = vector.shape_cast %62 : vector<1x64x128xf32> to vector<64x128xf32>
    %64 = vector.shape_cast %61 : vector<64x128xf32> to vector<1x64x128xf32>
    tpu.vector_store %arg5[%c0_46, %c0_47, %c0_48], %64 {strides = array<i32>} : memref<1x64x128xf32, #tpu.memory_space<vmem>>, vector<1x64x128xf32>,
    %cst_49 = arith.constant dense<0.000000e+00> : vector<128xf32>
    %65 = vector.multi_reduction <add>, %61, %cst_49 [0] : vector<64x128xf32> to vector<128xf32>
    %66 = vector.shape_cast %65 : vector<128xf32> to vector<1x128xf32>
    %67 = arith.mulf %61, %61 : vector<64x128xf32>
    %cst_50 = arith.constant dense<0.000000e+00> : vector<128xf32>
    %68 = vector.multi_reduction <add>, %67, %cst_50 [0] : vector<64x128xf32> to vector<128xf32>
    %69 = vector.shape_cast %68 : vector<128xf32> to vector<1x128xf32>
    %70 = tpu.concatenate %66, %69 in 0 : vector<1x128xf32>, vector<1x128xf32> -> vector<2x128xf32>
    %c0_i32 = arith.constant 0 : i32
    %71 = arith.cmpi eq, %arg0, %c0_i32 : i32
    %c0_i32_51 = arith.constant 0 : i32
    %72 = arith.cmpi eq, %arg1, %c0_i32_51 : i32
    %73 = arith.andi %71, %72 : i1
    %74 = arith.extui %73 : i1 to i32
    %c0_i32_52 = arith.constant 0 : i32
    %75 = arith.cmpi ne, %74, %c0_i32_52 : i32
    scf.if %75 {
      %cst_57 = arith.constant 0.000000e+00 : f32
      %79 = vector.broadcast %cst_57 : f32 to vector<2x128xf32>
      %c0_58 = arith.constant 0 : index
      %c0_59 = arith.constant 0 : index
      %80 = vector.load %arg6[%c0_58, %c0_59] : memref<2x128xf32, #tpu.memory_space<vmem>>, vector<2x128xf32>
      tpu.vector_store %arg6[%c0_58, %c0_59], %79 {strides = array<i32>} : memref<2x128xf32, #tpu.memory_space<vmem>>, vector<2x128xf32>,
    } else {
    }
    %c0_53 = arith.constant 0 : index
    %c0_54 = arith.constant 0 : index
    %76 = vector.load %arg6[%c0_53, %c0_54] : memref<2x128xf32, #tpu.memory_space<vmem>>, vector<2x128xf32>
    %77 = arith.addf %76, %70 : vector<2x128xf32>
    %c0_55 = arith.constant 0 : index
    %c0_56 = arith.constant 0 : index
    %78 = vector.load %arg6[%c0_55, %c0_56] : memref<2x128xf32, #tpu.memory_space<vmem>>, vector<2x128xf32>
    tpu.vector_store %arg6[%c0_55, %c0_56], %77 {strides = array<i32>} : memref<2x128xf32, #tpu.memory_space<vmem>>, vector<2x128xf32>,
    return
  }
  func.func @transform_0(%arg0: i32, %arg1: i32) -> (i32, i32, i32, i32, i32) {
    %c0_i32 = arith.constant 0 : i32
    %c0_i32_0 = arith.constant 0 : i32
    %c0_i32_1 = arith.constant 0 : i32
    %c0_i32_2 = arith.constant 0 : i32
    return %arg0, %arg1, %c0_i32, %c0_i32_0, %c0_i32_1 : i32, i32, i32, i32, i32
  }
  func.func @transform_1(%arg0: i32, %arg1: i32) -> (i32, i32, i32, i32, i32) {
    %c1_i32 = arith.constant 1 : i32
    %0 = arith.addi %arg1, %c1_i32 : i32
    %c8_i32 = arith.constant 8 : i32
    %1 = arith.muli %0, %c8_i32 : i32
    %c0_i32 = arith.constant 0 : i32
    %c0_i32_0 = arith.constant 0 : i32
    %c0_i32_1 = arith.constant 0 : i32
    %c0_i32_2 = arith.constant 0 : i32
    return %arg0, %1, %c0_i32, %c0_i32_0, %c0_i32_1 : i32, i32, i32, i32, i32
  }
  func.func @transform_2(%arg0: i32, %arg1: i32) -> (i32, i32, i32, i32) {
    %c0_i32 = arith.constant 0 : i32
    %c0_i32_0 = arith.constant 0 : i32
    %c0_i32_1 = arith.constant 0 : i32
    %c0_i32_2 = arith.constant 0 : i32
    %c0_i32_3 = arith.constant 0 : i32
    return %c0_i32, %c0_i32_0, %c0_i32_1, %c0_i32_2 : i32, i32, i32, i32
  }
  func.func @transform_3(%arg0: i32, %arg1: i32) -> (i32, i32, i32) {
    %c1_i32 = arith.constant 1 : i32
    %0 = arith.muli %arg0, %c1_i32 : i32
    %1 = arith.addi %0, %arg1 : i32
    %c0_i32 = arith.constant 0 : i32
    %c0_i32_0 = arith.constant 0 : i32
    %c0_i32_1 = arith.constant 0 : i32
    return %1, %c0_i32, %c0_i32_0 : i32, i32, i32
  }
  func.func @transform_4(%arg0: i32, %arg1: i32) -> (i32, i32) {
    %c0_i32 = arith.constant 0 : i32
    %c0_i32_0 = arith.constant 0 : i32
    %c0_i32_1 = arith.constant 0 : i32
    return %c0_i32, %c0_i32_0 : i32, i32
  }
}

module attributes {stable_mosaic.version = 11 : i64} {
  func.func @_bn_lrelu_kernel(%arg0: i32, %arg1: memref<128x128xf32, #tpu.memory_space<vmem>>, %arg2: memref<1x128xf32, #tpu.memory_space<vmem>>, %arg3: memref<1x128xf32, #tpu.memory_space<vmem>>, %arg4: memref<128x128xf32, #tpu.memory_space<vmem>>) attributes {dimension_semantics = [#tpu.dimension_semantics<parallel>], iteration_bounds = array<i64: 1>, scalar_prefetch = 0 : i64, scratch_operands = 0 : i64, tpu.core_type = #tpu.core_type<tc>, window_params = [{transform_indices = @transform_0, window_bounds = array<i64: 128, 128>}, {pipeline_mode = #tpu.pipeline_mode<synchronous>, transform_indices = @transform_1, window_bounds = array<i64: 1, 128>}, {pipeline_mode = #tpu.pipeline_mode<synchronous>, transform_indices = @transform_2, window_bounds = array<i64: 1, 128>}, {transform_indices = @transform_3, window_bounds = array<i64: 128, 128>}]} {
    %c0 = arith.constant 0 : index
    %c0_0 = arith.constant 0 : index
    %0 = vector.load %arg1[%c0, %c0_0] : memref<128x128xf32, #tpu.memory_space<vmem>>, vector<128x128xf32>
    %c0_1 = arith.constant 0 : index
    %c0_2 = arith.constant 0 : index
    %1 = vector.load %arg2[%c0_1, %c0_2] : memref<1x128xf32, #tpu.memory_space<vmem>>, vector<1x128xf32>
    %2 = vector.broadcast %1 : vector<1x128xf32> to vector<128x128xf32>
    %3 = arith.mulf %0, %2 : vector<128x128xf32>
    %c0_3 = arith.constant 0 : index
    %c0_4 = arith.constant 0 : index
    %4 = vector.load %arg3[%c0_3, %c0_4] : memref<1x128xf32, #tpu.memory_space<vmem>>, vector<1x128xf32>
    %5 = vector.broadcast %4 : vector<1x128xf32> to vector<128x128xf32>
    %6 = arith.addf %3, %5 : vector<128x128xf32>
    %cst = arith.constant 0.000000e+00 : f32
    %7 = vector.broadcast %cst : f32 to vector<128x128xf32>
    %8 = arith.cmpf oge, %6, %7 : vector<128x128xf32>
    %cst_5 = arith.constant 2.000000e-01 : f32
    %9 = vector.broadcast %cst_5 : f32 to vector<128x128xf32>
    %10 = arith.mulf %9, %6 : vector<128x128xf32>
    %11 = arith.select %8, %6, %10 : vector<128x128xi1>, vector<128x128xf32>
    %c0_6 = arith.constant 0 : index
    %c0_7 = arith.constant 0 : index
    %12 = vector.load %arg4[%c0_6, %c0_7] : memref<128x128xf32, #tpu.memory_space<vmem>>, vector<128x128xf32>
    tpu.vector_store %arg4[%c0_6, %c0_7], %11 {strides = array<i32>} : memref<128x128xf32, #tpu.memory_space<vmem>>, vector<128x128xf32>,
    return
  }
  func.func @transform_0(%arg0: i32) -> (i32, i32) {
    %c0_i32 = arith.constant 0 : i32
    %c0_i32_0 = arith.constant 0 : i32
    return %arg0, %c0_i32 : i32, i32
  }
  func.func @transform_1(%arg0: i32) -> (i32, i32) {
    %c0_i32 = arith.constant 0 : i32
    %c0_i32_0 = arith.constant 0 : i32
    %c0_i32_1 = arith.constant 0 : i32
    return %c0_i32, %c0_i32_0 : i32, i32
  }
  func.func @transform_2(%arg0: i32) -> (i32, i32) {
    %c0_i32 = arith.constant 0 : i32
    %c0_i32_0 = arith.constant 0 : i32
    %c0_i32_1 = arith.constant 0 : i32
    return %c0_i32, %c0_i32_0 : i32, i32
  }
  func.func @transform_3(%arg0: i32) -> (i32, i32) {
    %c0_i32 = arith.constant 0 : i32
    %c0_i32_0 = arith.constant 0 : i32
    return %arg0, %c0_i32 : i32, i32
  }
}

</mosaic_0001>

<llo_original>
// kernel: unet_encoder_block.3
$region0: #{unet_encoder_block.3}
  #allocation0 [shape = 'u32[]', space=smem, size = 0x4, offset = 0x4, fixed_abs, tag = 'smem constant byte address 0x4 - core index']
  #allocation1 [shape = 'u32[144,128]{1,0:T(1,128)}', space=vmem, size = 0x12000, scoped, tag = 'internal scratch']
  %s0 = inlined_call_operand.vmem [shape: f32[128,128], index: 0, kind: input, shape index: {}]
  %s1 = inlined_call_operand.vmem [shape: f32[1,128], index: 1, kind: input, shape index: {}]
  %s2 = inlined_call_operand.vmem [shape: f32[1,128], index: 2, kind: input, shape index: {}]
  %s3 = inlined_call_operand.vmem [shape: f32[128,128], index: 3, kind: output, shape index: {}]
  %s4 = sld [smem:[#allocation0]]
  $region22: #{unet_encoder_block.3} parent=0
    _
  %s6 = ssub.s32 1, %s4
  %s7 = scalar_select 0, %s6, %s4
  // Predicated region
  $region2: #{unet_encoder_block.3} parent=0 // pred_check
    _
  $region3: #{unet_encoder_block.3} parent=0 // pred_check_branch
    %9 = sbr.rel (0) target = $region5
  $region4: #{unet_encoder_block.3} parent=0 // pred_region
    _
  $region5: #{unet_encoder_block.3} parent=0 // pred_fallthru
    _
  // Predicated region
  $region6: #{unet_encoder_block.3} parent=0 // pred_check
    _
  $region7: #{unet_encoder_block.3} parent=0 // pred_check_branch
    %11 = sbr.rel (0) target = $region9
  $region8: #{unet_encoder_block.3} parent=0 // pred_region
    _
  $region9: #{unet_encoder_block.3} parent=0 // pred_fallthru
    _
  // Predicated region
  $region10: #{unet_encoder_block.3} parent=0 // pred_check
    _
  $region11: #{unet_encoder_block.3} parent=0 // pred_check_branch
    %13 = sbr.rel (0) target = $region13
  $region12: #{unet_encoder_block.3} parent=0 // pred_region
    _
  $region13: #{unet_encoder_block.3} parent=0 // pred_fallthru
    _
  %v14 = vld [vmem:[%s0] sm:$0xff]
  %v15 = vld [vmem:[%s0 + $0x8] sm:$0xff]
  %v16 = vld [vmem:[%s0 + $0x10] sm:$0xff]
  %v17 = vld [vmem:[%s0 + $0x18] sm:$0xff]
  %v18 = vld [vmem:[%s0 + $0x20] sm:$0xff]
  %v19 = vld [vmem:[%s0 + $0x28] sm:$0xff]
  %v20 = vld [vmem:[%s0 + $0x30] sm:$0xff]
  %v21 = vld [vmem:[%s0 + $0x38] sm:$0xff]
  %v22 = vld [vmem:[%s0 + $0x40] sm:$0xff]
  %v23 = vld [vmem:[%s0 + $0x48] sm:$0xff]
  %v24 = vld [vmem:[%s0 + $0x50] sm:$0xff]
  %v25 = vld [vmem:[%s0 + $0x58] sm:$0xff]
  %v26 = vld [vmem:[%s0 + $0x60] sm:$0xff]
  %v27 = vld [vmem:[%s0 + $0x68] sm:$0xff]
  %v28 = vld [vmem:[%s0 + $0x70] sm:$0xff]
  %v29 = vld [vmem:[%s0 + $0x78] sm:$0xff]
  %v30 = vld [vmem:[%s1] sm:$0x1]
  %v32 = vlaneseq
  %v33 = vshrl.u32 %v32, 7
  %v34 = vsub.s32 0, %v33
  %v35 = vrot.slane %v30, %v34
  %v37 = vmul.f32 %v14, %v35
  %v38 = vmul.f32 %v15, %v35
  %v39 = vmul.f32 %v16, %v35
  %v40 = vmul.f32 %v17, %v35
  %v41 = vmul.f32 %v18, %v35
  %v42 = vmul.f32 %v19, %v35
  %v43 = vmul.f32 %v20, %v35
  %v44 = vmul.f32 %v21, %v35
  %v45 = vmul.f32 %v22, %v35
  %v46 = vmul.f32 %v23, %v35
  %v47 = vmul.f32 %v24, %v35
  %v48 = vmul.f32 %v25, %v35
  %v49 = vmul.f32 %v26, %v35
  %v50 = vmul.f32 %v27, %v35
  %v51 = vmul.f32 %v28, %v35
  %v52 = vmul.f32 %v29, %v35
  %v53 = vld [vmem:[%s2] sm:$0x1]
  %v55 = vlaneseq
  %v56 = vshrl.u32 %v55, 7
  %v57 = vsub.s32 0, %v56
  %v58 = vrot.slane %v53, %v57
  %v60 = vadd.f32 %v37, %v58
  %v61 = vadd.f32 %v38, %v58
  %v62 = vadd.f32 %v39, %v58
  %v63 = vadd.f32 %v40, %v58
  %v64 = vadd.f32 %v41, %v58
  %v65 = vadd.f32 %v42, %v58
  %v66 = vadd.f32 %v43, %v58
  %v67 = vadd.f32 %v44, %v58
  %v68 = vadd.f32 %v45, %v58
  %v69 = vadd.f32 %v46, %v58
  %v70 = vadd.f32 %v47, %v58
  %v71 = vadd.f32 %v48, %v58
  %v72 = vadd.f32 %v49, %v58
  %v73 = vadd.f32 %v50, %v58
  %v74 = vadd.f32 %v51, %v58
  %v75 = vadd.f32 %v52, %v58
  %vm76 = vcmp.ge.f32.partialorder %v60, 0.0
  %vm77 = vcmp.ge.f32.partialorder %v61, 0.0
  %vm78 = vcmp.ge.f32.partialorder %v62, 0.0
  %vm79 = vcmp.ge.f32.partialorder %v63, 0.0
  %vm80 = vcmp.ge.f32.partialorder %v64, 0.0
  %vm81 = vcmp.ge.f32.partialorder %v65, 0.0
  %vm82 = vcmp.ge.f32.partialorder %v66, 0.0
  %vm83 = vcmp.ge.f32.partialorder %v67, 0.0
  %vm84 = vcmp.ge.f32.partialorder %v68, 0.0
  %vm85 = vcmp.ge.f32.partialorder %v69, 0.0
  %vm86 = vcmp.ge.f32.partialorder %v70, 0.0
  %vm87 = vcmp.ge.f32.partialorder %v71, 0.0
  %vm88 = vcmp.ge.f32.partialorder %v72, 0.0
  %vm89 = vcmp.ge.f32.partialorder %v73, 0.0
  %vm90 = vcmp.ge.f32.partialorder %v74, 0.0
  %vm91 = vcmp.ge.f32.partialorder %v75, 0.0
  %v92 = vmul.f32 %v60, 0.2
  %v93 = vmul.f32 %v61, 0.2
  %v94 = vmul.f32 %v62, 0.2
  %v95 = vmul.f32 %v63, 0.2
  %v96 = vmul.f32 %v64, 0.2
  %v97 = vmul.f32 %v65, 0.2
  %v98 = vmul.f32 %v66, 0.2
  %v99 = vmul.f32 %v67, 0.2
  %v100 = vmul.f32 %v68, 0.2
  %v101 = vmul.f32 %v69, 0.2
  %v102 = vmul.f32 %v70, 0.2
  %v103 = vmul.f32 %v71, 0.2
  %v104 = vmul.f32 %v72, 0.2
  %v105 = vmul.f32 %v73, 0.2
  %v106 = vmul.f32 %v74, 0.2
  %v107 = vmul.f32 %v75, 0.2
  %v108 = vsel %vm76, %v60, %v92
  %v109 = vsel %vm77, %v61, %v93
  %v110 = vsel %vm78, %v62, %v94
  %v111 = vsel %vm79, %v63, %v95
  %v112 = vsel %vm80, %v64, %v96
  %v113 = vsel %vm81, %v65, %v97
  %v114 = vsel %vm82, %v66, %v98
  %v115 = vsel %vm83, %v67, %v99
  %v116 = vsel %vm84, %v68, %v100
  %v117 = vsel %vm85, %v69, %v101
  %v118 = vsel %vm86, %v70, %v102
  %v119 = vsel %vm87, %v71, %v103
  %v120 = vsel %vm88, %v72, %v104
  %v121 = vsel %vm89, %v73, %v105
  %v122 = vsel %vm90, %v74, %v106
  %v123 = vsel %vm91, %v75, %v107
  %124 = vst [vmem:[%s3] sm:$0xff] %v108
  %125 = vst [vmem:[%s3 + $0x8] sm:$0xff] %v109
  %126 = vst [vmem:[%s3 + $0x10] sm:$0xff] %v110
  %127 = vst [vmem:[%s3 + $0x18] sm:$0xff] %v111
  %128 = vst [vmem:[%s3 + $0x20] sm:$0xff] %v112
  %129 = vst [vmem:[%s3 + $0x28] sm:$0xff] %v113
  %130 = vst [vmem:[%s3 + $0x30] sm:$0xff] %v114
  %131 = vst [vmem:[%s3 + $0x38] sm:$0xff] %v115
  %132 = vst [vmem:[%s3 + $0x40] sm:$0xff] %v116
  %133 = vst [vmem:[%s3 + $0x48] sm:$0xff] %v117
  %134 = vst [vmem:[%s3 + $0x50] sm:$0xff] %v118
  %135 = vst [vmem:[%s3 + $0x58] sm:$0xff] %v119
  %136 = vst [vmem:[%s3 + $0x60] sm:$0xff] %v120
  %137 = vst [vmem:[%s3 + $0x68] sm:$0xff] %v121
  %138 = vst [vmem:[%s3 + $0x70] sm:$0xff] %v122
  %139 = vst [vmem:[%s3 + $0x78] sm:$0xff] %v123
  // Predicated region
  $region14: #{unet_encoder_block.3} parent=0 // pred_check
    _
  $region15: #{unet_encoder_block.3} parent=0 // pred_check_branch
    %141 = sbr.rel (0) target = $region17
  $region16: #{unet_encoder_block.3} parent=0 // pred_region
    _
  $region17: #{unet_encoder_block.3} parent=0 // pred_fallthru
    _
  // Predicated region
  $region18: #{unet_encoder_block.3} parent=0 // pred_check
    _
  $region19: #{unet_encoder_block.3} parent=0 // pred_check_branch
    %143 = sbr.rel (0) target = $region21
  $region20: #{unet_encoder_block.3} parent=0 // pred_region
    _
  $region21: #{unet_encoder_block.3} parent=0 // pred_fallthru
    _

// kernel: unet_encoder_block.2
$region0: #{unet_encoder_block.2}
  #allocation0 [shape = 'u32[]', space=smem, size = 0x4, offset = 0x4, fixed_abs, tag = 'smem constant byte address 0x4 - core index']
  #allocation1 [shape = 'u32[144,128]{1,0:T(1,128)}', space=vmem, size = 0x12000, scoped, tag = 'internal scratch']
  %s0 = inlined_call_operand.vmem [shape: bf16[2,9,2,9,8], index: 0, kind: input, shape index: {}, may-alias: {0,1}]
  %s1 = inlined_call_operand.vmem [shape: bf16[2,9,2,9,8], index: 1, kind: input, shape index: {}, may-alias: {0,1}]
  %s2 = inlined_call_operand.vmem [shape: bf16[4,2,8,128], index: 2, kind: input, shape index: {}]
  %s3 = inlined_call_operand.vmem [shape: f32[2,64,128], index: 3, kind: output, shape index: {0}]
  %s4 = inlined_call_operand.vmem [shape: f32[2,128], index: 4, kind: output, shape index: {1}]
  %5 = xla_tuple %s3, %s4
  %s6 = sld [smem:[#allocation0]]
  $region57: #{unet_encoder_block.2} parent=0
    _
  %s8 = ssub.s32 1, %s6
  %s9 = scalar_select 0, %s8, %s6
  loop: start=0, step=1, limit=4
  $region2: #{unet_encoder_block.2} parent=0 // loop_pre_header
    _
  $region3: #{unet_encoder_block.2} parent=0 // loop_header
    %s11 = sphi 0, %s15
    %p12 = scmp.ge.s32.totalorder %s11, 4
    %s18 = sphi 0, %s30
    %s19 = sphi 0, %s26
    %s20 = sphi 0, %s18
    %s21 = sphi 0, %s19
    %s22 = sphi 0, %s20
    %s23 = sphi 0, %s21
    %s35 = sphi 0, %s37
    %s38 = sphi 0, %s35
    %s39 = sphi 0, %s38
    %s55 = sphi 0, %s39
    %s67 = sphi 0, %s69
    %s70 = sphi 0, %s67
    %s71 = sphi 0, %s70
    %s87 = sphi 0, %s71
    %s91 = sphi 0, %s91
    %s93 = sphi 0, %s91
    %s94 = sphi 0, %s93
    %s108 = sphi 0, %s94
    %s116 = sphi 0, %s118
    %s119 = sphi 0, %s116
    %s120 = sphi 0, %s119
    %s136 = sphi 0, %s120
    %s140 = sphi 0, %s140
    %s142 = sphi 0, %s140
    %s143 = sphi 0, %s142
    %s157 = sphi 0, %s143
  $region4: #{unet_encoder_block.2} parent=0 // loop_header_branch
    %14 = sbr.rel (%p12) target = $region8
  $region5: #{unet_encoder_block.2} parent=0 // loop_body
    %s16 = ssub.s32 %s11, 1
    %s17 = ssub.s32 %s11, 2
    %s24 = sadd.s32 1, %s19
    %p25 = scmp.ge.s32.totalorder %s24, 1
    %s26 = scalar_select %p25, 0, %s24
    %s27 = sadd.s32 1, %s18
    %s28 = scalar_select %p25, %s27, %s18
    %p29 = scmp.ge.s32.totalorder %s28, 2
    %s30 = scalar_select %p29, 0, %s28
    %s31 = ssub.s32 %s18, %s30
    %s32 = ssub.s32 %s19, %s26
    %s33 = sor.u32 %s31, %s32
    %p34 = scmp.eq.s32.totalorder %s33, 0
    %s36 = sadd.s32 %s35, 1
    %s37 = scalar_select %p34, %s35, %s36
    %p40 = pneg %p34
    %p41 = scmp.eq.s32.totalorder %s11, 1
    %p42 = por %p40, %p41
    %p43 = scmp.ne.s32.totalorder %s35, %s38
    %p44 = scmp.eq.s32.totalorder %s11, 0
    %p45 = por %p43, %p44
    %p46 = scmp.ne.s32.totalorder %s35, %s38
    %p47 = scmp.eq.s32.totalorder %s16, 1
    %p48 = por %p46, %p47
    %p49 = scmp.ne.s32.totalorder %s38, %s39
    %p50 = scmp.eq.s32.totalorder %s16, 0
    %p51 = por %p49, %p50
    %p52 = scmp.ne.s32.totalorder %s38, %s39
    %p53 = scmp.eq.s32.totalorder %s17, 1
    %p54 = por %p52, %p53
    %p56 = scmp.ne.s32.totalorder %s39, %s55
    %p57 = scmp.eq.s32.totalorder %s17, 0
    %p58 = por %p56, %p57
    %s59 = sadd.s32 %s19, 1
    %s60 = smul.u32 %s59, 8
    %s61 = sadd.s32 %s26, 1
    %s62 = smul.u32 %s61, 8
    %s63 = ssub.s32 %s18, %s30
    %s64 = ssub.s32 %s60, %s62
    %s65 = sor.u32 %s63, %s64
    %p66 = scmp.eq.s32.totalorder %s65, 0
    %s68 = sadd.s32 %s67, 1
    %s69 = scalar_select %p66, %s67, %s68
    %p72 = pneg %p66
    %p73 = scmp.eq.s32.totalorder %s11, 1
    %p74 = por %p72, %p73
    %p75 = scmp.ne.s32.totalorder %s67, %s70
    %p76 = scmp.eq.s32.totalorder %s11, 0
    %p77 = por %p75, %p76
    %p78 = scmp.ne.s32.totalorder %s67, %s70
    %p79 = scmp.eq.s32.totalorder %s16, 1
    %p80 = por %p78, %p79
    %p81 = scmp.ne.s32.totalorder %s70, %s71
    %p82 = scmp.eq.s32.totalorder %s16, 0
    %p83 = por %p81, %p82
    %p84 = scmp.ne.s32.totalorder %s70, %s71
    %p85 = scmp.eq.s32.totalorder %s17, 1
    %p86 = por %p84, %p85
    %p88 = scmp.ne.s32.totalorder %s71, %s87
    %p89 = scmp.eq.s32.totalorder %s17, 0
    %p90 = por %p88, %p89
    %s92 = sadd.s32 %s91, 1
    %p95 = scmp.eq.s32.totalorder %s11, 1
    %p96 = scmp.ne.s32.totalorder %s91, %s93
    %p97 = scmp.eq.s32.totalorder %s11, 0
    %p98 = por %p96, %p97
    %p99 = scmp.ne.s32.totalorder %s91, %s93
    %p100 = scmp.eq.s32.totalorder %s16, 1
    %p101 = por %p99, %p100
    %p102 = scmp.ne.s32.totalorder %s93, %s94
    %p103 = scmp.eq.s32.totalorder %s16, 0
    %p104 = por %p102, %p103
    %p105 = scmp.ne.s32.totalorder %s93, %s94
    %p106 = scmp.eq.s32.totalorder %s17, 1
    %p107 = por %p105, %p106
    %p109 = scmp.ne.s32.totalorder %s94, %s108
    %p110 = scmp.eq.s32.totalorder %s17, 0
    %p111 = por %p109, %p110
    %s112 = sadd.s32 %s18, %s19
    %s113 = sadd.s32 %s30, %s26
    %s114 = ssub.s32 %s112, %s113
    %p115 = scmp.eq.s32.totalorder %s114, 0
    %s117 = sadd.s32 %s116, 1
    %s118 = scalar_select %p115, %s116, %s117
    %p121 = pneg %p115
    %p122 = scmp.eq.s32.totalorder %s11, 1
    %p123 = por %p121, %p122
    %p124 = scmp.ne.s32.totalorder %s116, %s119
    %p125 = scmp.eq.s32.totalorder %s11, 0
    %p126 = por %p124, %p125
    %p127 = scmp.ne.s32.totalorder %s116, %s119
    %p128 = scmp.eq.s32.totalorder %s16, 1
    %p129 = por %p127, %p128
    %p130 = scmp.ne.s32.totalorder %s119, %s120
    %p131 = scmp.eq.s32.totalorder %s16, 0
    %p132 = por %p130, %p131
    %p133 = scmp.ne.s32.totalorder %s119, %s120
    %p134 = scmp.eq.s32.totalorder %s17, 1
    %p135 = por %p133, %p134
    %p137 = scmp.ne.s32.totalorder %s120, %s136
    %p138 = scmp.eq.s32.totalorder %s17, 0
    %p139 = por %p137, %p138
    %s141 = sadd.s32 %s140, 1
    %p144 = scmp.eq.s32.totalorder %s11, 1
    %p145 = scmp.ne.s32.totalorder %s140, %s142
    %p146 = scmp.eq.s32.totalorder %s11, 0
    %p147 = por %p145, %p146
    %p148 = scmp.ne.s32.totalorder %s140, %s142
    %p149 = scmp.eq.s32.totalorder %s16, 1
    %p150 = por %p148, %p149
    %p151 = scmp.ne.s32.totalorder %s142, %s143
    %p152 = scmp.eq.s32.totalorder %s16, 0
    %p153 = por %p151, %p152
    %p154 = scmp.ne.s32.totalorder %s142, %s143
    %p155 = scmp.eq.s32.totalorder %s17, 1
    %p156 = por %p154, %p155
    %p158 = scmp.ne.s32.totalorder %s143, %s157
    %p159 = scmp.eq.s32.totalorder %s17, 0
    %p160 = por %p158, %p159
    %p161 = scmp.le.s32.totalorder 1, %s11
    %p162 = scmp.lt.s32.totalorder %s11, 3
    %p163 = pnand %p161, %p162
    %p164 = pneg %p163
    // Predicated region
    $region9: #{unet_encoder_block.2} parent=5 // pred_check
      _
    $region10: #{unet_encoder_block.2} parent=5 // pred_check_branch
      %166 = sbr.rel (%p163) target = $region12
    $region11: #{unet_encoder_block.2} parent=5 // pred_region
      %s167 = ssub.s32 %s11, 1
      // Predicated region
      $region13: #{unet_encoder_block.2} parent=11 // pred_check
        %p168 = pneg %p104
      $region14: #{unet_encoder_block.2} parent=11 // pred_check_branch
        %170 = sbr.rel (%p168) target = $region16
      $region15: #{unet_encoder_block.2} parent=11 // pred_region
        _
      $region16: #{unet_encoder_block.2} parent=11 // pred_fallthru
        _
    $region12: #{unet_encoder_block.2} parent=5 // pred_fallthru
      _
    %p171 = scmp.lt.s32.totalorder %s11, 2
    // Predicated region
    $region17: #{unet_encoder_block.2} parent=5 // pred_check
      %p172 = pneg %p171
    $region18: #{unet_encoder_block.2} parent=5 // pred_check_branch
      %174 = sbr.rel (%p172) target = $region20
    $region19: #{unet_encoder_block.2} parent=5 // pred_region
      // Predicated region
      $region21: #{unet_encoder_block.2} parent=19 // pred_check
        %p175 = pneg %p45
      $region22: #{unet_encoder_block.2} parent=19 // pred_check_branch
        %177 = sbr.rel (%p175) target = $region24
      $region23: #{unet_encoder_block.2} parent=19 // pred_region
        %s178 = smul.u32 8, %s19
        %s179 = ssub.s32 9, %s178
        %p180 = scmp.lt.s32.totalorder %s179, 8
        %s181 = scalar_select %p180, %s179, 8
        %s182 = smul.u32 64, %s181
        %s183 = smul.u32 %s182, 2
        %s184 = smul.u32 %s183, 2
        %p185 = scmp.lt.s32.totalorder %s18, 1
        %s186 = scalar_select %p185, %s18, 1
        %p187 = scmp.lt.s32.totalorder %s178, 8
        %s188 = scalar_select %p187, %s178, 8
        %s189 = smul.addr %s188, 4
        %s190 = smul.addr %s186, 36
        %s191 = sadd.s32 %s189, %s190
        %s192 = smul.addr %s191, 4
        %s193 = scalar_lea.vmem %s0, %s192
        %s194 = smul.u32 8, %s19
        %s195 = ssub.s32 9, %s194
        %p196 = scmp.lt.s32.totalorder %s195, 8
        %s197 = scalar_select %p196, %s195, 8
        %s198 = smul.u32 64, %s197
        %s199 = smul.u32 %s198, 2
        %s200 = smul.u32 %s199, 2
      $region24: #{unet_encoder_block.2} parent=19 // pred_fallthru
        _
      // Predicated region
      $region25: #{unet_encoder_block.2} parent=19 // pred_check
        %p201 = pneg %p77
      $region26: #{unet_encoder_block.2} parent=19 // pred_check_branch
        %203 = sbr.rel (%p201) target = $region28
      $region27: #{unet_encoder_block.2} parent=19 // pred_region
        %s204 = sadd.s32 %s19, 1
        %s205 = smul.u32 %s204, 8
        %p206 = scmp.lt.s32.totalorder %s18, 1
        %s207 = scalar_select %p206, %s18, 1
        %p208 = scmp.lt.s32.totalorder %s205, 8
        %s209 = scalar_select %p208, %s205, 8
        %s210 = smul.addr %s209, 4
        %s211 = smul.addr %s207, 36
        %s212 = sadd.s32 %s210, %s211
        %s213 = smul.addr %s212, 4
        %s214 = scalar_lea.vmem %s1, %s213
        %s215 = sadd.s32 %s19, 1
        %s216 = smul.u32 %s215, 8
      $region28: #{unet_encoder_block.2} parent=19 // pred_fallthru
        _
    $region20: #{unet_encoder_block.2} parent=5 // pred_fallthru
      _
    %p217 = scmp.le.s32.totalorder 1, %s11
    %p218 = scmp.lt.s32.totalorder %s11, 3
    %p219 = pnand %p217, %p218
    %p220 = pneg %p219
    // Predicated region
    $region29: #{unet_encoder_block.2} parent=5 // pred_check
      _
    $region30: #{unet_encoder_block.2} parent=5 // pred_check_branch
      %222 = sbr.rel (%p219) target = $region32
    $region31: #{unet_encoder_block.2} parent=5 // pred_region
      %s223 = ssub.s32 %s11, 1
      %s224 = smul.u32 8, %s21
      %s225 = ssub.s32 9, %s224
      %p226 = scmp.lt.s32.totalorder %s225, 8
      %s227 = scalar_select %p226, %s225, 8
      %s228 = smul.u32 64, %s227
      %s229 = smul.u32 %s228, 2
      %s230 = smul.u32 %s229, 2
      %p231 = scmp.lt.s32.totalorder %s20, 1
      %s232 = scalar_select %p231, %s20, 1
      %p233 = scmp.lt.s32.totalorder %s224, 8
      %s234 = scalar_select %p233, %s224, 8
      %s235 = smul.addr %s234, 4
      %s236 = smul.addr %s232, 36
      %s237 = sadd.s32 %s235, %s236
      %s238 = smul.addr %s237, 4
      %s239 = scalar_lea.vmem %s0, %s238
      %p240 = pneg %p51
      %p241 = pneg %p48
      %s242 = sadd.s32 %s21, 1
      %s243 = smul.u32 %s242, 8
      %p244 = scmp.lt.s32.totalorder %s20, 1
      %s245 = scalar_select %p244, %s20, 1
      %p246 = scmp.lt.s32.totalorder %s243, 8
      %s247 = scalar_select %p246, %s243, 8
      %s248 = smul.addr %s247, 4
      %s249 = smul.addr %s245, 36
      %s250 = sadd.s32 %s248, %s249
      %s251 = smul.addr %s250, 4
      %s252 = scalar_lea.vmem %s1, %s251
      %p253 = pneg %p83
      %p254 = pneg %p80
      %p255 = pneg %p104
      %p256 = pneg %p101
      %p257 = pneg %p132
      %p258 = pneg %p129
      %s259 = sadd.s32 %s20, %s21
      %p260 = scmp.lt.s32.totalorder %s259, 1
      %s261 = scalar_select %p260, %s259, 1
      %s262 = smul.addr %s261, 8
      %s263 = smul.addr %s262, 8
      %s264 = scalar_lea.vmem %s3, %s263
      %p265 = pneg %p153
      %p266 = pneg %p150
      %s267 = smul.u32 8, %s21
      %s268 = ssub.s32 9, %s267
      %p269 = scmp.lt.s32.totalorder %s268, 8
      %s270 = scalar_select %p269, %s268, 8
      %s271 = smul.u32 64, %s270
      %s272 = smul.u32 %s271, 2
      %s273 = smul.u32 %s272, 2
      %p274 = scmp.lt.s32.totalorder %s20, 1
      %s275 = scalar_select %p274, %s20, 1
      %p276 = scmp.lt.s32.totalorder %s267, 8
      %s277 = scalar_select %p276, %s267, 8
      %s278 = smul.addr %s277, 4
      %s279 = smul.addr %s275, 36
      %s280 = sadd.s32 %s278, %s279
      %s281 = smul.addr %s280, 4
      %s282 = scalar_lea.vmem %s0, %s281
      %s283 = smul.u32 8, %s21
      %s284 = ssub.s32 9, %s283
      %p285 = scmp.lt.s32.totalorder %s284, 8
      %s286 = scalar_select %p285, %s284, 8
      %s287 = smul.u32 64, %s286
      %s288 = smul.u32 %s287, 2
      %s289 = smul.u32 %s288, 2
      %s290 = sadd.s32 %s21, 1
      %s291 = smul.u32 %s290, 8
      %p292 = scmp.lt.s32.totalorder %s20, 1
      %s293 = scalar_select %p292, %s20, 1
      %p294 = scmp.lt.s32.totalorder %s291, 8
      %s295 = scalar_select %p294, %s291, 8
      %s296 = smul.addr %s295, 4
      %s297 = smul.addr %s293, 36
      %s298 = sadd.s32 %s296, %s297
      %s299 = smul.addr %s298, 4
      %s300 = scalar_lea.vmem %s1, %s299
      %s301 = sadd.s32 %s21, 1
      %s302 = smul.u32 %s301, 8
      %s303 = sadd.s32 %s20, %s21
      %p304 = scmp.lt.s32.totalorder %s303, 1
      %s305 = scalar_select %p304, %s303, 1
      %s306 = smul.addr %s305, 8
      %s307 = smul.addr %s306, 8
      %s308 = scalar_lea.vmem %s3, %s307
      %s309 = sadd.s32 %s20, %s21
      %v311 = vld [vmem:[%s282] sm:$0xf]
      %v312 = vld [vmem:[%s282 + $0x4] sm:$0x1]
      %v313 = vld [vmem:[%s282 + $0x8] sm:$0xf]
      %v314 = vld [vmem:[%s282 + $0xc] sm:$0x1]
      %v315 = vld [vmem:[%s282 + $0x10] sm:$0xf]
      %v316 = vld [vmem:[%s282 + $0x14] sm:$0x1]
      %v317 = vld [vmem:[%s282 + $0x18] sm:$0xf]
      %v318 = vld [vmem:[%s282 + $0x1c] sm:$0x1]
      %v319 = vld [vmem:[%s282 + $0x20] sm:$0xf]
      %v320 = vld [vmem:[%s282 + $0x24] sm:$0x1]
      %v321 = vld [vmem:[%s282 + $0x28] sm:$0xf]
      %v322 = vld [vmem:[%s282 + $0x2c] sm:$0x1]
      %v323 = vld [vmem:[%s282 + $0x30] sm:$0xf]
      %v324 = vld [vmem:[%s282 + $0x34] sm:$0x1]
      %v325 = vld [vmem:[%s282 + $0x38] sm:$0xf]
      %v326 = vld [vmem:[%s282 + $0x3c] sm:$0x1]
      %v327 = vld [vmem:[%s282 + $0x40] sm:$0xf]
      %v328 = vld [vmem:[%s282 + $0x44] sm:$0x1]
      %v329 = vld [vmem:[%s282 + $0x48] sm:$0xf]
      %v330 = vld [vmem:[%s282 + $0x4c] sm:$0x1]
      %v331 = vld [vmem:[%s282 + $0x50] sm:$0xf]
      %v332 = vld [vmem:[%s282 + $0x54] sm:$0x1]
      %v333 = vld [vmem:[%s282 + $0x58] sm:$0xf]
      %v334 = vld [vmem:[%s282 + $0x5c] sm:$0x1]
      %v335 = vld [vmem:[%s282 + $0x60] sm:$0xf]
      %v336 = vld [vmem:[%s282 + $0x64] sm:$0x1]
      %v337 = vld [vmem:[%s282 + $0x68] sm:$0xf]
      %v338 = vld [vmem:[%s282 + $0x6c] sm:$0x1]
      %v339 = vld [vmem:[%s282 + $0x70] sm:$0xf]
      %v340 = vld [vmem:[%s282 + $0x74] sm:$0x1]
      %v341 = vld [vmem:[%s282 + $0x78] sm:$0xf]
      %v342 = vld [vmem:[%s282 + $0x7c] sm:$0x1]
      %v343 = vld [vmem:[%s300] sm:$0xf]
      %v344 = vld [vmem:[%s300 + $0x4] sm:$0x1]
      %v345 = vld [vmem:[%s300 + $0x8] sm:$0xf]
      %v346 = vld [vmem:[%s300 + $0xc] sm:$0x1]
      %v347 = vld [vmem:[%s2] sm:$0xf]
      %vm348 = vsmask.f32 3328
      %vm349 = vsmask.f32 7440
      %vm350 = vmor %vm348, %vm349
      %v352 = vshrl.u32 %v311, 16
      %v354 = vrot.slane %v352, 4
      %v355 = vshll.u32 %v311, 16
      %v357 = vrot.slane %v355, 5
      %v358 = vor.u32 %v354, %v357
      %v359 = vrot.slane %v358, 4
      %v361 = vshll.u32 %v312, 16
      %v363 = vrot.slane %v361, 5
      %v364 = vsel %vm350, %v359, %v363
      %v366 = vshrl.u32 %v315, 16
      %v368 = vrot.slane %v366, 4
      %v369 = vshll.u32 %v315, 16
      %v371 = vrot.slane %v369, 5
      %v372 = vor.u32 %v368, %v371
      %v373 = vrot.slane %v372, 4
      %v375 = vshll.u32 %v316, 16
      %v377 = vrot.slane %v375, 5
      %v378 = vsel %vm350, %v373, %v377
      %v380 = vshrl.u32 %v319, 16
      %v382 = vrot.slane %v380, 4
      %v383 = vshll.u32 %v319, 16
      %v385 = vrot.slane %v383, 5
      %v386 = vor.u32 %v382, %v385
      %v387 = vrot.slane %v386, 4
      %v389 = vshll.u32 %v320, 16
      %v391 = vrot.slane %v389, 5
      %v392 = vsel %vm350, %v387, %v391
      %v394 = vshrl.u32 %v323, 16
      %v396 = vrot.slane %v394, 4
      %v397 = vshll.u32 %v323, 16
      %v399 = vrot.slane %v397, 5
      %v400 = vor.u32 %v396, %v399
      %v401 = vrot.slane %v400, 4
      %v403 = vshll.u32 %v324, 16
      %v405 = vrot.slane %v403, 5
      %v406 = vsel %vm350, %v401, %v405
      %v408 = vshrl.u32 %v327, 16
      %v410 = vrot.slane %v408, 4
      %v411 = vshll.u32 %v327, 16
      %v413 = vrot.slane %v411, 5
      %v414 = vor.u32 %v410, %v413
      %v415 = vrot.slane %v414, 4
      %v417 = vshll.u32 %v328, 16
      %v419 = vrot.slane %v417, 5
      %v420 = vsel %vm350, %v415, %v419
      %v422 = vshrl.u32 %v331, 16
      %v424 = vrot.slane %v422, 4
      %v425 = vshll.u32 %v331, 16
      %v427 = vrot.slane %v425, 5
      %v428 = vor.u32 %v424, %v427
      %v429 = vrot.slane %v428, 4
      %v431 = vshll.u32 %v332, 16
      %v433 = vrot.slane %v431, 5
      %v434 = vsel %vm350, %v429, %v433
      %v436 = vshrl.u32 %v335, 16
      %v438 = vrot.slane %v436, 4
      %v439 = vshll.u32 %v335, 16
      %v441 = vrot.slane %v439, 5
      %v442 = vor.u32 %v438, %v441
      %v443 = vrot.slane %v442, 4
      %v445 = vshll.u32 %v336, 16
      %v447 = vrot.slane %v445, 5
      %v448 = vsel %vm350, %v443, %v447
      %v450 = vshrl.u32 %v339, 16
      %v452 = vrot.slane %v450, 4
      %v453 = vshll.u32 %v339, 16
      %v455 = vrot.slane %v453, 5
      %v456 = vor.u32 %v452, %v455
      %v457 = vrot.slane %v456, 4
      %v459 = vshll.u32 %v340, 16
      %v461 = vrot.slane %v459, 5
      %v462 = vsel %vm350, %v457, %v461
      %s463 = scalar_lea.vmem %s2, 4
      %v464 = vld [vmem:[%s463] sm:$0xf]
      %v465 = vunpack.c.l.b16 %v364
      %v466 = vunpack.c.l.b16 %v378
      %v467 = vunpack.c.l.b16 %v392
      %v468 = vunpack.c.l.b16 %v406
      %v469 = vunpack.c.l.b16 %v420
      %v470 = vunpack.c.l.b16 %v434
      %v471 = vunpack.c.l.b16 %v448
      %v472 = vunpack.c.l.b16 %v462
      %v473 = vpack.c.b16 %v466, %v465
      %v474 = vpack.c.b16 %v468, %v467
      %v475 = vpack.c.b16 %v470, %v469
      %v476 = vpack.c.b16 %v472, %v471
      %vm477 = vcmask 64512
      %v479 = vsel %vm477, %v473, 0
      %v482 = vsel %vm477, %v474, 0
      %v485 = vsel %vm477, %v475, 0
      %v488 = vsel %vm477, %v476, 0
      %vm490 = vcmask 1043456
      %v492 = vsel %vm490, %v464, 0
      %494 = vmatprep.subr.bf16.mxu0 0
      %495 = vmatpush1.bf16.msra.mxu0 0
      %496 = vmatprep.subr.bf16.mxu0 0
      %497 = vmatpush1.bf16.msra.mxu0 0
      %498 = vmatprep.subr.bf16.mxu0 0
      %499 = vmatpush1.bf16.msra.mxu0 0
      %500 = vmatprep.subr.bf16.mxu0 0
      %501 = vmatpush1.bf16.msra.mxu0 0
      %502 = vmatprep.subr.bf16.mxu0 0
      %503 = vmatpush1.bf16.msra.mxu0 0
      %504 = vmatprep.subr.bf16.mxu0 0
      %505 = vmatpush1.bf16.msra.mxu0 0
      %506 = vmatprep.subr.bf16.mxu0 0
      %507 = vmatpush1.bf16.msra.mxu0 0
      %508 = vmatprep.subr.bf16.mxu0 0
      %509 = vmatpush1.bf16.msra.mxu0 %v492
      %510 = vmatprep.subr.bf16.mxu0 0
      %511 = vmatpush2.bf16.msra.mxu0 0
      %512 = vmatprep.subr.bf16.mxu0 0
      %513 = vmatpush2.bf16.msra.mxu0 0
      %514 = vmatprep.subr.bf16.mxu0 0
      %515 = vmatpush2.bf16.msra.mxu0 0
      %516 = vmatprep.subr.bf16.mxu0 0
      %517 = vmatpush2.bf16.msra.mxu0 0
      %518 = vmatprep.subr.bf16.mxu0 0
      %519 = vmatpush2.bf16.msra.mxu0 0
      %520 = vmatprep.subr.bf16.mxu0 0
      %521 = vmatpush2.bf16.msra.mxu0 0
      %522 = vmatprep.subr.bf16.mxu0 0
      %523 = vmatpush2.bf16.msra.mxu0 0
      %524 = vmatprep.subr.bf16.mxu0 0
      %525 = vmatpush2.bf16.msra.mxu0 0
      %526 = vmatprep.mubr.bf16.mxu0 0
      %527 = vmatmul.mubr.bf16.gmra.mxu0 %v479
      %v528 = vpop.f32.mrf.mxu0
      %v529 = vadd.f32 0.0, %v528
      %v530 = vpop.f32.mrf.mxu0
      %v531 = vpop.f32.mrf.mxu0
      %v532 = vadd.f32 0.0, %v531
      %v533 = vpop.f32.mrf.mxu0
      %534 = vmatprep.mubr.bf16.mxu0 0
      %535 = vmatmul.mubr.bf16.gmra.mxu0 %v482
      %v536 = vpop.f32.mrf.mxu0
      %v537 = vadd.f32 0.0, %v536
      %v538 = vpop.f32.mrf.mxu0
      %v539 = vpop.f32.mrf.mxu0
      %v540 = vadd.f32 0.0, %v539
      %v541 = vpop.f32.mrf.mxu0
      %542 = vmatprep.mubr.bf16.mxu0 0
      %543 = vmatmul.mubr.bf16.gmra.mxu0 %v485
      %v544 = vpop.f32.mrf.mxu0
      %v545 = vadd.f32 0.0, %v544
      %v546 = vpop.f32.mrf.mxu0
      %v547 = vpop.f32.mrf.mxu0
      %v548 = vadd.f32 0.0, %v547
      %v549 = vpop.f32.mrf.mxu0
      %550 = vmatprep.mubr.bf16.mxu0 0
      %551 = vmatmul.mubr.bf16.gmra.mxu0 %v488
      %v552 = vpop.f32.mrf.mxu0
      %v553 = vadd.f32 0.0, %v552
      %v554 = vpop.f32.mrf.mxu0
      %v555 = vpop.f32.mrf.mxu0
      %v556 = vadd.f32 0.0, %v555
      %v557 = vpop.f32.mrf.mxu0
      %558 = vdwg.mxu0
      %v567 = vunpack.c.l.b16 %v311
      %v568 = vunpack.c.l.b16 %v315
      %v569 = vunpack.c.l.b16 %v319
      %v570 = vunpack.c.l.b16 %v323
      %v571 = vunpack.c.l.b16 %v327
      %v572 = vunpack.c.l.b16 %v331
      %v573 = vunpack.c.l.b16 %v335
      %v574 = vunpack.c.l.b16 %v339
      %v575 = vpack.c.b16 %v568, %v567
      %v576 = vpack.c.b16 %v570, %v569
      %v577 = vpack.c.b16 %v572, %v571
      %v578 = vpack.c.b16 %v574, %v573
      %v580 = vsel %vm477, %v575, 0
      %v583 = vsel %vm477, %v576, 0
      %v586 = vsel %vm477, %v577, 0
      %v589 = vsel %vm477, %v578, 0
      %v592 = vsel %vm490, %v347, 0
      %594 = vmatprep.subr.bf16.mxu0 0
      %595 = vmatpush1.bf16.msra.mxu0 0
      %596 = vmatprep.subr.bf16.mxu0 0
      %597 = vmatpush1.bf16.msra.mxu0 0
      %598 = vmatprep.subr.bf16.mxu0 0
      %599 = vmatpush1.bf16.msra.mxu0 0
      %600 = vmatprep.subr.bf16.mxu0 0
      %601 = vmatpush1.bf16.msra.mxu0 0
      %602 = vmatprep.subr.bf16.mxu0 0
      %603 = vmatpush1.bf16.msra.mxu0 0
      %604 = vmatprep.subr.bf16.mxu0 0
      %605 = vmatpush1.bf16.msra.mxu0 0
      %606 = vmatprep.subr.bf16.mxu0 0
      %607 = vmatpush1.bf16.msra.mxu0 0
      %608 = vmatprep.subr.bf16.mxu0 0
      %609 = vmatpush1.bf16.msra.mxu0 %v592
      %610 = vmatprep.subr.bf16.mxu0 0
      %611 = vmatpush2.bf16.msra.mxu0 0
      %612 = vmatprep.subr.bf16.mxu0 0
      %613 = vmatpush2.bf16.msra.mxu0 0
      %614 = vmatprep.subr.bf16.mxu0 0
      %615 = vmatpush2.bf16.msra.mxu0 0
      %616 = vmatprep.subr.bf16.mxu0 0
      %617 = vmatpush2.bf16.msra.mxu0 0
      %618 = vmatprep.subr.bf16.mxu0 0
      %619 = vmatpush2.bf16.msra.mxu0 0
      %620 = vmatprep.subr.bf16.mxu0 0
      %621 = vmatpush2.bf16.msra.mxu0 0
      %622 = vmatprep.subr.bf16.mxu0 0
      %623 = vmatpush2.bf16.msra.mxu0 0
      %624 = vmatprep.subr.bf16.mxu0 0
      %625 = vmatpush2.bf16.msra.mxu0 0
      %626 = vmatprep.mubr.bf16.mxu0 0
      %627 = vmatmul.mubr.bf16.gmra.mxu0 %v580
      %v628 = vpop.f32.mrf.mxu0
      %v629 = vadd.f32 %v529, %v628
      %v630 = vpop.f32.mrf.mxu0
      %v631 = vpop.f32.mrf.mxu0
      %v632 = vadd.f32 %v532, %v631
      %v633 = vpop.f32.mrf.mxu0
      %634 = vmatprep.mubr.bf16.mxu0 0
      %635 = vmatmul.mubr.bf16.gmra.mxu0 %v583
      %v636 = vpop.f32.mrf.mxu0
      %v637 = vadd.f32 %v537, %v636
      %v638 = vpop.f32.mrf.mxu0
      %v639 = vpop.f32.mrf.mxu0
      %v640 = vadd.f32 %v540, %v639
      %v641 = vpop.f32.mrf.mxu0
      %642 = vmatprep.mubr.bf16.mxu0 0
      %643 = vmatmul.mubr.bf16.gmra.mxu0 %v586
      %v644 = vpop.f32.mrf.mxu0
      %v645 = vadd.f32 %v545, %v644
      %v646 = vpop.f32.mrf.mxu0
      %v647 = vpop.f32.mrf.mxu0
      %v648 = vadd.f32 %v548, %v647
      %v649 = vpop.f32.mrf.mxu0
      %650 = vmatprep.mubr.bf16.mxu0 0
      %651 = vmatmul.mubr.bf16.gmra.mxu0 %v589
      %v652 = vpop.f32.mrf.mxu0
      %v653 = vadd.f32 %v553, %v652
      %v654 = vpop.f32.mrf.mxu0
      %v655 = vpop.f32.mrf.mxu0
      %v656 = vadd.f32 %v556, %v655
      %v657 = vpop.f32.mrf.mxu0
      %658 = vdwg.mxu0
      %s659 = scalar_lea.vmem %s2, 8
      %v660 = vld [vmem:[%s659] sm:$0xf]
      %v669 = vunpack.c.l.b16 %v313
      %v670 = vunpack.c.l.b16 %v317
      %v671 = vunpack.c.l.b16 %v321
      %v672 = vunpack.c.l.b16 %v325
      %v673 = vunpack.c.l.b16 %v329
      %v674 = vunpack.c.l.b16 %v333
      %v675 = vunpack.c.l.b16 %v337
      %v676 = vunpack.c.l.b16 %v341
      %v677 = vpack.c.b16 %v670, %v669
      %v678 = vpack.c.b16 %v672, %v671
      %v679 = vpack.c.b16 %v674, %v673
      %v680 = vpack.c.b16 %v676, %v675
      %v682 = vsel %vm477, %v677, 0
      %v685 = vsel %vm477, %v678, 0
      %v688 = vsel %vm477, %v679, 0
      %v691 = vsel %vm477, %v680, 0
      %v694 = vsel %vm490, %v660, 0
      %696 = vmatprep.subr.bf16.mxu0 0
      %697 = vmatpush1.bf16.msra.mxu0 0
      %698 = vmatprep.subr.bf16.mxu0 0
      %699 = vmatpush1.bf16.msra.mxu0 0
      %700 = vmatprep.subr.bf16.mxu0 0
      %701 = vmatpush1.bf16.msra.mxu0 0
      %702 = vmatprep.subr.bf16.mxu0 0
      %703 = vmatpush1.bf16.msra.mxu0 0
      %704 = vmatprep.subr.bf16.mxu0 0
      %705 = vmatpush1.bf16.msra.mxu0 0
      %706 = vmatprep.subr.bf16.mxu0 0
      %707 = vmatpush1.bf16.msra.mxu0 0
      %708 = vmatprep.subr.bf16.mxu0 0
      %709 = vmatpush1.bf16.msra.mxu0 0
      %710 = vmatprep.subr.bf16.mxu0 0
      %711 = vmatpush1.bf16.msra.mxu0 %v694
      %712 = vmatprep.subr.bf16.mxu0 0
      %713 = vmatpush2.bf16.msra.mxu0 0
      %714 = vmatprep.subr.bf16.mxu0 0
      %715 = vmatpush2.bf16.msra.mxu0 0
      %716 = vmatprep.subr.bf16.mxu0 0
      %717 = vmatpush2.bf16.msra.mxu0 0
      %718 = vmatprep.subr.bf16.mxu0 0
      %719 = vmatpush2.bf16.msra.mxu0 0
      %720 = vmatprep.subr.bf16.mxu0 0
      %721 = vmatpush2.bf16.msra.mxu0 0
      %722 = vmatprep.subr.bf16.mxu0 0
      %723 = vmatpush2.bf16.msra.mxu0 0
      %724 = vmatprep.subr.bf16.mxu0 0
      %725 = vmatpush2.bf16.msra.mxu0 0
      %726 = vmatprep.subr.bf16.mxu0 0
      %727 = vmatpush2.bf16.msra.mxu0 0
      %728 = vmatprep.mubr.bf16.mxu0 0
      %729 = vmatmul.mubr.bf16.gmra.mxu0 %v682
      %v730 = vpop.f32.mrf.mxu0
      %v731 = vadd.f32 0.0, %v730
      %v732 = vpop.f32.mrf.mxu0
      %v733 = vpop.f32.mrf.mxu0
      %v734 = vadd.f32 0.0, %v733
      %v735 = vpop.f32.mrf.mxu0
      %736 = vmatprep.mubr.bf16.mxu0 0
      %737 = vmatmul.mubr.bf16.gmra.mxu0 %v685
      %v738 = vpop.f32.mrf.mxu0
      %v739 = vadd.f32 0.0, %v738
      %v740 = vpop.f32.mrf.mxu0
      %v741 = vpop.f32.mrf.mxu0
      %v742 = vadd.f32 0.0, %v741
      %v743 = vpop.f32.mrf.mxu0
      %744 = vmatprep.mubr.bf16.mxu0 0
      %745 = vmatmul.mubr.bf16.gmra.mxu0 %v688
      %v746 = vpop.f32.mrf.mxu0
      %v747 = vadd.f32 0.0, %v746
      %v748 = vpop.f32.mrf.mxu0
      %v749 = vpop.f32.mrf.mxu0
      %v750 = vadd.f32 0.0, %v749
      %v751 = vpop.f32.mrf.mxu0
      %752 = vmatprep.mubr.bf16.mxu0 0
      %753 = vmatmul.mubr.bf16.gmra.mxu0 %v691
      %v754 = vpop.f32.mrf.mxu0
      %v755 = vadd.f32 0.0, %v754
      %v756 = vpop.f32.mrf.mxu0
      %v757 = vpop.f32.mrf.mxu0
      %v758 = vadd.f32 0.0, %v757
      %v759 = vpop.f32.mrf.mxu0
      %760 = vdwg.mxu0
      %v761 = vadd.f32 %v629, %v731
      %v762 = vadd.f32 %v632, %v734
      %v763 = vadd.f32 %v637, %v739
      %v764 = vadd.f32 %v640, %v742
      %v765 = vadd.f32 %v645, %v747
      %v766 = vadd.f32 %v648, %v750
      %v767 = vadd.f32 %v653, %v755
      %v768 = vadd.f32 %v656, %v758
      %v770 = vshrl.u32 %v313, 16
      %v772 = vrot.slane %v770, 4
      %v773 = vshll.u32 %v313, 16
      %v775 = vrot.slane %v773, 5
      %v776 = vor.u32 %v772, %v775
      %v777 = vrot.slane %v776, 4
      %v779 = vshll.u32 %v314, 16
      %v781 = vrot.slane %v779, 5
      %v782 = vsel %vm350, %v777, %v781
      %v784 = vshrl.u32 %v317, 16
      %v786 = vrot.slane %v784, 4
      %v787 = vshll.u32 %v317, 16
      %v789 = vrot.slane %v787, 5
      %v790 = vor.u32 %v786, %v789
      %v791 = vrot.slane %v790, 4
      %v793 = vshll.u32 %v318, 16
      %v795 = vrot.slane %v793, 5
      %v796 = vsel %vm350, %v791, %v795
      %v798 = vshrl.u32 %v321, 16
      %v800 = vrot.slane %v798, 4
      %v801 = vshll.u32 %v321, 16
      %v803 = vrot.slane %v801, 5
      %v804 = vor.u32 %v800, %v803
      %v805 = vrot.slane %v804, 4
      %v807 = vshll.u32 %v322, 16
      %v809 = vrot.slane %v807, 5
      %v810 = vsel %vm350, %v805, %v809
      %v812 = vshrl.u32 %v325, 16
      %v814 = vrot.slane %v812, 4
      %v815 = vshll.u32 %v325, 16
      %v817 = vrot.slane %v815, 5
      %v818 = vor.u32 %v814, %v817
      %v819 = vrot.slane %v818, 4
      %v821 = vshll.u32 %v326, 16
      %v823 = vrot.slane %v821, 5
      %v824 = vsel %vm350, %v819, %v823
      %v826 = vshrl.u32 %v329, 16
      %v828 = vrot.slane %v826, 4
      %v829 = vshll.u32 %v329, 16
      %v831 = vrot.slane %v829, 5
      %v832 = vor.u32 %v828, %v831
      %v833 = vrot.slane %v832, 4
      %v835 = vshll.u32 %v330, 16
      %v837 = vrot.slane %v835, 5
      %v838 = vsel %vm350, %v833, %v837
      %v840 = vshrl.u32 %v333, 16
      %v842 = vrot.slane %v840, 4
      %v843 = vshll.u32 %v333, 16
      %v845 = vrot.slane %v843, 5
      %v846 = vor.u32 %v842, %v845
      %v847 = vrot.slane %v846, 4
      %v849 = vshll.u32 %v334, 16
      %v851 = vrot.slane %v849, 5
      %v852 = vsel %vm350, %v847, %v851
      %v854 = vshrl.u32 %v337, 16
      %v856 = vrot.slane %v854, 4
      %v857 = vshll.u32 %v337, 16
      %v859 = vrot.slane %v857, 5
      %v860 = vor.u32 %v856, %v859
      %v861 = vrot.slane %v860, 4
      %v863 = vshll.u32 %v338, 16
      %v865 = vrot.slane %v863, 5
      %v866 = vsel %vm350, %v861, %v865
      %v868 = vshrl.u32 %v341, 16
      %v870 = vrot.slane %v868, 4
      %v871 = vshll.u32 %v341, 16
      %v873 = vrot.slane %v871, 5
      %v874 = vor.u32 %v870, %v873
      %v875 = vrot.slane %v874, 4
      %v877 = vshll.u32 %v342, 16
      %v879 = vrot.slane %v877, 5
      %v880 = vsel %vm350, %v875, %v879
      %s881 = scalar_lea.vmem %s2, 12
      %v882 = vld [vmem:[%s881] sm:$0xf]
      %v883 = vunpack.c.l.b16 %v782
      %v884 = vunpack.c.l.b16 %v796
      %v885 = vunpack.c.l.b16 %v810
      %v886 = vunpack.c.l.b16 %v824
      %v887 = vunpack.c.l.b16 %v838
      %v888 = vunpack.c.l.b16 %v852
      %v889 = vunpack.c.l.b16 %v866
      %v890 = vunpack.c.l.b16 %v880
      %v891 = vpack.c.b16 %v884, %v883
      %v892 = vpack.c.b16 %v886, %v885
      %v893 = vpack.c.b16 %v888, %v887
      %v894 = vpack.c.b16 %v890, %v889
      %v896 = vsel %vm477, %v891, 0
      %v899 = vsel %vm477, %v892, 0
      %v902 = vsel %vm477, %v893, 0
      %v905 = vsel %vm477, %v894, 0
      %v908 = vsel %vm490, %v882, 0
      %910 = vmatprep.subr.bf16.mxu0 0
      %911 = vmatpush1.bf16.msra.mxu0 0
      %912 = vmatprep.subr.bf16.mxu0 0
      %913 = vmatpush1.bf16.msra.mxu0 0
      %914 = vmatprep.subr.bf16.mxu0 0
      %915 = vmatpush1.bf16.msra.mxu0 0
      %916 = vmatprep.subr.bf16.mxu0 0
      %917 = vmatpush1.bf16.msra.mxu0 0
      %918 = vmatprep.subr.bf16.mxu0 0
      %919 = vmatpush1.bf16.msra.mxu0 0
      %920 = vmatprep.subr.bf16.mxu0 0
      %921 = vmatpush1.bf16.msra.mxu0 0
      %922 = vmatprep.subr.bf16.mxu0 0
      %923 = vmatpush1.bf16.msra.mxu0 0
      %924 = vmatprep.subr.bf16.mxu0 0
      %925 = vmatpush1.bf16.msra.mxu0 %v908
      %926 = vmatprep.subr.bf16.mxu0 0
      %927 = vmatpush2.bf16.msra.mxu0 0
      %928 = vmatprep.subr.bf16.mxu0 0
      %929 = vmatpush2.bf16.msra.mxu0 0
      %930 = vmatprep.subr.bf16.mxu0 0
      %931 = vmatpush2.bf16.msra.mxu0 0
      %932 = vmatprep.subr.bf16.mxu0 0
      %933 = vmatpush2.bf16.msra.mxu0 0
      %934 = vmatprep.subr.bf16.mxu0 0
      %935 = vmatpush2.bf16.msra.mxu0 0
      %936 = vmatprep.subr.bf16.mxu0 0
      %937 = vmatpush2.bf16.msra.mxu0 0
      %938 = vmatprep.subr.bf16.mxu0 0
      %939 = vmatpush2.bf16.msra.mxu0 0
      %940 = vmatprep.subr.bf16.mxu0 0
      %941 = vmatpush2.bf16.msra.mxu0 0
      %942 = vmatprep.mubr.bf16.mxu0 0
      %943 = vmatmul.mubr.bf16.gmra.mxu0 %v896
      %v944 = vpop.f32.mrf.mxu0
      %v945 = vadd.f32 0.0, %v944
      %v946 = vpop.f32.mrf.mxu0
      %v947 = vpop.f32.mrf.mxu0
      %v948 = vadd.f32 0.0, %v947
      %v949 = vpop.f32.mrf.mxu0
      %950 = vmatprep.mubr.bf16.mxu0 0
      %951 = vmatmul.mubr.bf16.gmra.mxu0 %v899
      %v952 = vpop.f32.mrf.mxu0
      %v953 = vadd.f32 0.0, %v952
      %v954 = vpop.f32.mrf.mxu0
      %v955 = vpop.f32.mrf.mxu0
      %v956 = vadd.f32 0.0, %v955
      %v957 = vpop.f32.mrf.mxu0
      %958 = vmatprep.mubr.bf16.mxu0 0
      %959 = vmatmul.mubr.bf16.gmra.mxu0 %v902
      %v960 = vpop.f32.mrf.mxu0
      %v961 = vadd.f32 0.0, %v960
      %v962 = vpop.f32.mrf.mxu0
      %v963 = vpop.f32.mrf.mxu0
      %v964 = vadd.f32 0.0, %v963
      %v965 = vpop.f32.mrf.mxu0
      %966 = vmatprep.mubr.bf16.mxu0 0
      %967 = vmatmul.mubr.bf16.gmra.mxu0 %v905
      %v968 = vpop.f32.mrf.mxu0
      %v969 = vadd.f32 0.0, %v968
      %v970 = vpop.f32.mrf.mxu0
      %v971 = vpop.f32.mrf.mxu0
      %v972 = vadd.f32 0.0, %v971
      %v973 = vpop.f32.mrf.mxu0
      %974 = vdwg.mxu0
      %v975 = vadd.f32 %v761, %v945
      %v976 = vadd.f32 %v762, %v948
      %v977 = vadd.f32 %v763, %v953
      %v978 = vadd.f32 %v764, %v956
      %v979 = vadd.f32 %v765, %v961
      %v980 = vadd.f32 %v766, %v964
      %v981 = vadd.f32 %v767, %v969
      %v982 = vadd.f32 %v768, %v972
      %s983 = scalar_lea.vmem %s2, 16
      %v984 = vld [vmem:[%s983] sm:$0xf]
      %v986 = vunpack.c.l.b16 %v343
      %v987 = vpack.c.b16 %v569, %v568
      %v988 = vpack.c.b16 %v571, %v570
      %v989 = vpack.c.b16 %v573, %v572
      %v990 = vpack.c.b16 %v986, %v574
      %v992 = vsel %vm477, %v987, 0
      %v995 = vsel %vm477, %v988, 0
      %v998 = vsel %vm477, %v989, 0
      %v1001 = vsel %vm477, %v990, 0
      %v1004 = vsel %vm490, %v984, 0
      %1006 = vmatprep.subr.bf16.mxu0 0
      %1007 = vmatpush1.bf16.msra.mxu0 0
      %1008 = vmatprep.subr.bf16.mxu0 0
      %1009 = vmatpush1.bf16.msra.mxu0 0
      %1010 = vmatprep.subr.bf16.mxu0 0
      %1011 = vmatpush1.bf16.msra.mxu0 0
      %1012 = vmatprep.subr.bf16.mxu0 0
      %1013 = vmatpush1.bf16.msra.mxu0 0
      %1014 = vmatprep.subr.bf16.mxu0 0
      %1015 = vmatpush1.bf16.msra.mxu0 0
      %1016 = vmatprep.subr.bf16.mxu0 0
      %1017 = vmatpush1.bf16.msra.mxu0 0
      %1018 = vmatprep.subr.bf16.mxu0 0
      %1019 = vmatpush1.bf16.msra.mxu0 0
      %1020 = vmatprep.subr.bf16.mxu0 0
      %1021 = vmatpush1.bf16.msra.mxu0 %v1004
      %1022 = vmatprep.subr.bf16.mxu0 0
      %1023 = vmatpush2.bf16.msra.mxu0 0
      %1024 = vmatprep.subr.bf16.mxu0 0
      %1025 = vmatpush2.bf16.msra.mxu0 0
      %1026 = vmatprep.subr.bf16.mxu0 0
      %1027 = vmatpush2.bf16.msra.mxu0 0
      %1028 = vmatprep.subr.bf16.mxu0 0
      %1029 = vmatpush2.bf16.msra.mxu0 0
      %1030 = vmatprep.subr.bf16.mxu0 0
      %1031 = vmatpush2.bf16.msra.mxu0 0
      %1032 = vmatprep.subr.bf16.mxu0 0
      %1033 = vmatpush2.bf16.msra.mxu0 0
      %1034 = vmatprep.subr.bf16.mxu0 0
      %1035 = vmatpush2.bf16.msra.mxu0 0
      %1036 = vmatprep.subr.bf16.mxu0 0
      %1037 = vmatpush2.bf16.msra.mxu0 0
      %1038 = vmatprep.mubr.bf16.mxu0 0
      %1039 = vmatmul.mubr.bf16.gmra.mxu0 %v992
      %v1040 = vpop.f32.mrf.mxu0
      %v1041 = vadd.f32 0.0, %v1040
      %v1042 = vpop.f32.mrf.mxu0
      %v1043 = vpop.f32.mrf.mxu0
      %v1044 = vadd.f32 0.0, %v1043
      %v1045 = vpop.f32.mrf.mxu0
      %1046 = vmatprep.mubr.bf16.mxu0 0
      %1047 = vmatmul.mubr.bf16.gmra.mxu0 %v995
      %v1048 = vpop.f32.mrf.mxu0
      %v1049 = vadd.f32 0.0, %v1048
      %v1050 = vpop.f32.mrf.mxu0
      %v1051 = vpop.f32.mrf.mxu0
      %v1052 = vadd.f32 0.0, %v1051
      %v1053 = vpop.f32.mrf.mxu0
      %1054 = vmatprep.mubr.bf16.mxu0 0
      %1055 = vmatmul.mubr.bf16.gmra.mxu0 %v998
      %v1056 = vpop.f32.mrf.mxu0
      %v1057 = vadd.f32 0.0, %v1056
      %v1058 = vpop.f32.mrf.mxu0
      %v1059 = vpop.f32.mrf.mxu0
      %v1060 = vadd.f32 0.0, %v1059
      %v1061 = vpop.f32.mrf.mxu0
      %1062 = vmatprep.mubr.bf16.mxu0 0
      %1063 = vmatmul.mubr.bf16.gmra.mxu0 %v1001
      %v1064 = vpop.f32.mrf.mxu0
      %v1065 = vadd.f32 0.0, %v1064
      %v1066 = vpop.f32.mrf.mxu0
      %v1067 = vpop.f32.mrf.mxu0
      %v1068 = vadd.f32 0.0, %v1067
      %v1069 = vpop.f32.mrf.mxu0
      %1070 = vdwg.mxu0
      %v1071 = vadd.f32 %v975, %v1041
      %v1072 = vadd.f32 %v976, %v1044
      %v1073 = vadd.f32 %v977, %v1049
      %v1074 = vadd.f32 %v978, %v1052
      %v1075 = vadd.f32 %v979, %v1057
      %v1076 = vadd.f32 %v980, %v1060
      %v1077 = vadd.f32 %v981, %v1065
      %v1078 = vadd.f32 %v982, %v1068
      %v1080 = vshrl.u32 %v343, 16
      %v1082 = vrot.slane %v1080, 4
      %v1083 = vshll.u32 %v343, 16
      %v1085 = vrot.slane %v1083, 5
      %v1086 = vor.u32 %v1082, %v1085
      %v1087 = vrot.slane %v1086, 4
      %v1089 = vshll.u32 %v344, 16
      %v1091 = vrot.slane %v1089, 5
      %v1092 = vsel %vm350, %v1087, %v1091
      %s1093 = scalar_lea.vmem %s2, 20
      %v1094 = vld [vmem:[%s1093] sm:$0xf]
      %v1095 = vunpack.c.l.b16 %v1092
      %v1096 = vpack.c.b16 %v467, %v466
      %v1097 = vpack.c.b16 %v469, %v468
      %v1098 = vpack.c.b16 %v471, %v470
      %v1099 = vpack.c.b16 %v1095, %v472
      %v1101 = vsel %vm477, %v1096, 0
      %v1104 = vsel %vm477, %v1097, 0
      %v1107 = vsel %vm477, %v1098, 0
      %v1110 = vsel %vm477, %v1099, 0
      %v1113 = vsel %vm490, %v1094, 0
      %1115 = vmatprep.subr.bf16.mxu0 0
      %1116 = vmatpush1.bf16.msra.mxu0 0
      %1117 = vmatprep.subr.bf16.mxu0 0
      %1118 = vmatpush1.bf16.msra.mxu0 0
      %1119 = vmatprep.subr.bf16.mxu0 0
      %1120 = vmatpush1.bf16.msra.mxu0 0
      %1121 = vmatprep.subr.bf16.mxu0 0
      %1122 = vmatpush1.bf16.msra.mxu0 0
      %1123 = vmatprep.subr.bf16.mxu0 0
      %1124 = vmatpush1.bf16.msra.mxu0 0
      %1125 = vmatprep.subr.bf16.mxu0 0
      %1126 = vmatpush1.bf16.msra.mxu0 0
      %1127 = vmatprep.subr.bf16.mxu0 0
      %1128 = vmatpush1.bf16.msra.mxu0 0
      %1129 = vmatprep.subr.bf16.mxu0 0
      %1130 = vmatpush1.bf16.msra.mxu0 %v1113
      %1131 = vmatprep.subr.bf16.mxu0 0
      %1132 = vmatpush2.bf16.msra.mxu0 0
      %1133 = vmatprep.subr.bf16.mxu0 0
      %1134 = vmatpush2.bf16.msra.mxu0 0
      %1135 = vmatprep.subr.bf16.mxu0 0
      %1136 = vmatpush2.bf16.msra.mxu0 0
      %1137 = vmatprep.subr.bf16.mxu0 0
      %1138 = vmatpush2.bf16.msra.mxu0 0
      %1139 = vmatprep.subr.bf16.mxu0 0
      %1140 = vmatpush2.bf16.msra.mxu0 0
      %1141 = vmatprep.subr.bf16.mxu0 0
      %1142 = vmatpush2.bf16.msra.mxu0 0
      %1143 = vmatprep.subr.bf16.mxu0 0
      %1144 = vmatpush2.bf16.msra.mxu0 0
      %1145 = vmatprep.subr.bf16.mxu0 0
      %1146 = vmatpush2.bf16.msra.mxu0 0
      %1147 = vmatprep.mubr.bf16.mxu0 0
      %1148 = vmatmul.mubr.bf16.gmra.mxu0 %v1101
      %v1149 = vpop.f32.mrf.mxu0
      %v1150 = vadd.f32 0.0, %v1149
      %v1151 = vpop.f32.mrf.mxu0
      %v1152 = vpop.f32.mrf.mxu0
      %v1153 = vadd.f32 0.0, %v1152
      %v1154 = vpop.f32.mrf.mxu0
      %1155 = vmatprep.mubr.bf16.mxu0 0
      %1156 = vmatmul.mubr.bf16.gmra.mxu0 %v1104
      %v1157 = vpop.f32.mrf.mxu0
      %v1158 = vadd.f32 0.0, %v1157
      %v1159 = vpop.f32.mrf.mxu0
      %v1160 = vpop.f32.mrf.mxu0
      %v1161 = vadd.f32 0.0, %v1160
      %v1162 = vpop.f32.mrf.mxu0
      %1163 = vmatprep.mubr.bf16.mxu0 0
      %1164 = vmatmul.mubr.bf16.gmra.mxu0 %v1107
      %v1165 = vpop.f32.mrf.mxu0
      %v1166 = vadd.f32 0.0, %v1165
      %v1167 = vpop.f32.mrf.mxu0
      %v1168 = vpop.f32.mrf.mxu0
      %v1169 = vadd.f32 0.0, %v1168
      %v1170 = vpop.f32.mrf.mxu0
      %1171 = vmatprep.mubr.bf16.mxu0 0
      %1172 = vmatmul.mubr.bf16.gmra.mxu0 %v1110
      %v1173 = vpop.f32.mrf.mxu0
      %v1174 = vadd.f32 0.0, %v1173
      %v1175 = vpop.f32.mrf.mxu0
      %v1176 = vpop.f32.mrf.mxu0
      %v1177 = vadd.f32 0.0, %v1176
      %v1178 = vpop.f32.mrf.mxu0
      %1179 = vdwg.mxu0
      %v1180 = vadd.f32 %v1071, %v1150
      %v1181 = vadd.f32 %v1072, %v1153
      %v1182 = vadd.f32 %v1073, %v1158
      %v1183 = vadd.f32 %v1074, %v1161
      %v1184 = vadd.f32 %v1075, %v1166
      %v1185 = vadd.f32 %v1076, %v1169
      %v1186 = vadd.f32 %v1077, %v1174
      %v1187 = vadd.f32 %v1078, %v1177
      %s1188 = scalar_lea.vmem %s2, 24
      %v1189 = vld [vmem:[%s1188] sm:$0xf]
      %v1191 = vunpack.c.l.b16 %v345
      %v1192 = vpack.c.b16 %v671, %v670
      %v1193 = vpack.c.b16 %v673, %v672
      %v1194 = vpack.c.b16 %v675, %v674
      %v1195 = vpack.c.b16 %v1191, %v676
      %v1197 = vsel %vm477, %v1192, 0
      %v1200 = vsel %vm477, %v1193, 0
      %v1203 = vsel %vm477, %v1194, 0
      %v1206 = vsel %vm477, %v1195, 0
      %v1209 = vsel %vm490, %v1189, 0
      %1211 = vmatprep.subr.bf16.mxu0 0
      %1212 = vmatpush1.bf16.msra.mxu0 0
      %1213 = vmatprep.subr.bf16.mxu0 0
      %1214 = vmatpush1.bf16.msra.mxu0 0
      %1215 = vmatprep.subr.bf16.mxu0 0
      %1216 = vmatpush1.bf16.msra.mxu0 0
      %1217 = vmatprep.subr.bf16.mxu0 0
      %1218 = vmatpush1.bf16.msra.mxu0 0
      %1219 = vmatprep.subr.bf16.mxu0 0
      %1220 = vmatpush1.bf16.msra.mxu0 0
      %1221 = vmatprep.subr.bf16.mxu0 0
      %1222 = vmatpush1.bf16.msra.mxu0 0
      %1223 = vmatprep.subr.bf16.mxu0 0
      %1224 = vmatpush1.bf16.msra.mxu0 0
      %1225 = vmatprep.subr.bf16.mxu0 0
      %1226 = vmatpush1.bf16.msra.mxu0 %v1209
      %1227 = vmatprep.subr.bf16.mxu0 0
      %1228 = vmatpush2.bf16.msra.mxu0 0
      %1229 = vmatprep.subr.bf16.mxu0 0
      %1230 = vmatpush2.bf16.msra.mxu0 0
      %1231 = vmatprep.subr.bf16.mxu0 0
      %1232 = vmatpush2.bf16.msra.mxu0 0
      %1233 = vmatprep.subr.bf16.mxu0 0
      %1234 = vmatpush2.bf16.msra.mxu0 0
      %1235 = vmatprep.subr.bf16.mxu0 0
      %1236 = vmatpush2.bf16.msra.mxu0 0
      %1237 = vmatprep.subr.bf16.mxu0 0
      %1238 = vmatpush2.bf16.msra.mxu0 0
      %1239 = vmatprep.subr.bf16.mxu0 0
      %1240 = vmatpush2.bf16.msra.mxu0 0
      %1241 = vmatprep.subr.bf16.mxu0 0
      %1242 = vmatpush2.bf16.msra.mxu0 0
      %1243 = vmatprep.mubr.bf16.mxu0 0
      %1244 = vmatmul.mubr.bf16.gmra.mxu0 %v1197
      %v1245 = vpop.f32.mrf.mxu0
      %v1246 = vadd.f32 0.0, %v1245
      %v1247 = vpop.f32.mrf.mxu0
      %v1248 = vpop.f32.mrf.mxu0
      %v1249 = vadd.f32 0.0, %v1248
      %v1250 = vpop.f32.mrf.mxu0
      %1251 = vmatprep.mubr.bf16.mxu0 0
      %1252 = vmatmul.mubr.bf16.gmra.mxu0 %v1200
      %v1253 = vpop.f32.mrf.mxu0
      %v1254 = vadd.f32 0.0, %v1253
      %v1255 = vpop.f32.mrf.mxu0
      %v1256 = vpop.f32.mrf.mxu0
      %v1257 = vadd.f32 0.0, %v1256
      %v1258 = vpop.f32.mrf.mxu0
      %1259 = vmatprep.mubr.bf16.mxu0 0
      %1260 = vmatmul.mubr.bf16.gmra.mxu0 %v1203
      %v1261 = vpop.f32.mrf.mxu0
      %v1262 = vadd.f32 0.0, %v1261
      %v1263 = vpop.f32.mrf.mxu0
      %v1264 = vpop.f32.mrf.mxu0
      %v1265 = vadd.f32 0.0, %v1264
      %v1266 = vpop.f32.mrf.mxu0
      %1267 = vmatprep.mubr.bf16.mxu0 0
      %1268 = vmatmul.mubr.bf16.gmra.mxu0 %v1206
      %v1269 = vpop.f32.mrf.mxu0
      %v1270 = vadd.f32 0.0, %v1269
      %v1271 = vpop.f32.mrf.mxu0
      %v1272 = vpop.f32.mrf.mxu0
      %v1273 = vadd.f32 0.0, %v1272
      %v1274 = vpop.f32.mrf.mxu0
      %1275 = vdwg.mxu0
      %v1276 = vadd.f32 %v1180, %v1246
      %v1277 = vadd.f32 %v1181, %v1249
      %v1278 = vadd.f32 %v1182, %v1254
      %v1279 = vadd.f32 %v1183, %v1257
      %v1280 = vadd.f32 %v1184, %v1262
      %v1281 = vadd.f32 %v1185, %v1265
      %v1282 = vadd.f32 %v1186, %v1270
      %v1283 = vadd.f32 %v1187, %v1273
      %v1285 = vshrl.u32 %v345, 16
      %v1287 = vrot.slane %v1285, 4
      %v1288 = vshll.u32 %v345, 16
      %v1290 = vrot.slane %v1288, 5
      %v1291 = vor.u32 %v1287, %v1290
      %v1292 = vrot.slane %v1291, 4
      %v1294 = vshll.u32 %v346, 16
      %v1296 = vrot.slane %v1294, 5
      %v1297 = vsel %vm350, %v1292, %v1296
      %s1298 = scalar_lea.vmem %s2, 28
      %v1299 = vld [vmem:[%s1298] sm:$0xf]
      %v1300 = vunpack.c.l.b16 %v1297
      %v1301 = vpack.c.b16 %v885, %v884
      %v1302 = vpack.c.b16 %v887, %v886
      %v1303 = vpack.c.b16 %v889, %v888
      %v1304 = vpack.c.b16 %v1300, %v890
      %v1306 = vsel %vm477, %v1301, 0
      %v1309 = vsel %vm477, %v1302, 0
      %v1312 = vsel %vm477, %v1303, 0
      %v1315 = vsel %vm477, %v1304, 0
      %v1318 = vsel %vm490, %v1299, 0
      %1320 = vmatprep.subr.bf16.mxu0 0
      %1321 = vmatpush1.bf16.msra.mxu0 0
      %1322 = vmatprep.subr.bf16.mxu0 0
      %1323 = vmatpush1.bf16.msra.mxu0 0
      %1324 = vmatprep.subr.bf16.mxu0 0
      %1325 = vmatpush1.bf16.msra.mxu0 0
      %1326 = vmatprep.subr.bf16.mxu0 0
      %1327 = vmatpush1.bf16.msra.mxu0 0
      %1328 = vmatprep.subr.bf16.mxu0 0
      %1329 = vmatpush1.bf16.msra.mxu0 0
      %1330 = vmatprep.subr.bf16.mxu0 0
      %1331 = vmatpush1.bf16.msra.mxu0 0
      %1332 = vmatprep.subr.bf16.mxu0 0
      %1333 = vmatpush1.bf16.msra.mxu0 0
      %1334 = vmatprep.subr.bf16.mxu0 0
      %1335 = vmatpush1.bf16.msra.mxu0 %v1318
      %1336 = vmatprep.subr.bf16.mxu0 0
      %1337 = vmatpush2.bf16.msra.mxu0 0
      %1338 = vmatprep.subr.bf16.mxu0 0
      %1339 = vmatpush2.bf16.msra.mxu0 0
      %1340 = vmatprep.subr.bf16.mxu0 0
      %1341 = vmatpush2.bf16.msra.mxu0 0
      %1342 = vmatprep.subr.bf16.mxu0 0
      %1343 = vmatpush2.bf16.msra.mxu0 0
      %1344 = vmatprep.subr.bf16.mxu0 0
      %1345 = vmatpush2.bf16.msra.mxu0 0
      %1346 = vmatprep.subr.bf16.mxu0 0
      %1347 = vmatpush2.bf16.msra.mxu0 0
      %1348 = vmatprep.subr.bf16.mxu0 0
      %1349 = vmatpush2.bf16.msra.mxu0 0
      %1350 = vmatprep.subr.bf16.mxu0 0
      %1351 = vmatpush2.bf16.msra.mxu0 0
      %1352 = vmatprep.mubr.bf16.mxu0 0
      %1353 = vmatmul.mubr.bf16.gmra.mxu0 %v1306
      %v1354 = vpop.f32.mrf.mxu0
      %v1355 = vadd.f32 0.0, %v1354
      %v1356 = vpop.f32.mrf.mxu0
      %v1357 = vpop.f32.mrf.mxu0
      %v1358 = vadd.f32 0.0, %v1357
      %v1359 = vpop.f32.mrf.mxu0
      %1360 = vmatprep.mubr.bf16.mxu0 0
      %1361 = vmatmul.mubr.bf16.gmra.mxu0 %v1309
      %v1362 = vpop.f32.mrf.mxu0
      %v1363 = vadd.f32 0.0, %v1362
      %v1364 = vpop.f32.mrf.mxu0
      %v1365 = vpop.f32.mrf.mxu0
      %v1366 = vadd.f32 0.0, %v1365
      %v1367 = vpop.f32.mrf.mxu0
      %1368 = vmatprep.mubr.bf16.mxu0 0
      %1369 = vmatmul.mubr.bf16.gmra.mxu0 %v1312
      %v1370 = vpop.f32.mrf.mxu0
      %v1371 = vadd.f32 0.0, %v1370
      %v1372 = vpop.f32.mrf.mxu0
      %v1373 = vpop.f32.mrf.mxu0
      %v1374 = vadd.f32 0.0, %v1373
      %v1375 = vpop.f32.mrf.mxu0
      %1376 = vmatprep.mubr.bf16.mxu0 0
      %1377 = vmatmul.mubr.bf16.gmra.mxu0 %v1315
      %v1378 = vpop.f32.mrf.mxu0
      %v1379 = vadd.f32 0.0, %v1378
      %v1380 = vpop.f32.mrf.mxu0
      %v1381 = vpop.f32.mrf.mxu0
      %v1382 = vadd.f32 0.0, %v1381
      %v1383 = vpop.f32.mrf.mxu0
      %1384 = vdwg.mxu0
      %v1385 = vadd.f32 %v1276, %v1355
      %v1386 = vadd.f32 %v1277, %v1358
      %v1387 = vadd.f32 %v1278, %v1363
      %v1388 = vadd.f32 %v1279, %v1366
      %v1389 = vadd.f32 %v1280, %v1371
      %v1390 = vadd.f32 %v1281, %v1374
      %v1391 = vadd.f32 %v1282, %v1379
      %v1392 = vadd.f32 %v1283, %v1382
      %1393 = vst [vmem:[%s308] sm:$0xff] %v1385
      %1394 = vst [vmem:[%s308 + $0x8] sm:$0xff] %v1386
      %1395 = vst [vmem:[%s308 + $0x10] sm:$0xff] %v1387
      %1396 = vst [vmem:[%s308 + $0x18] sm:$0xff] %v1388
      %1397 = vst [vmem:[%s308 + $0x20] sm:$0xff] %v1389
      %1398 = vst [vmem:[%s308 + $0x28] sm:$0xff] %v1390
      %1399 = vst [vmem:[%s308 + $0x30] sm:$0xff] %v1391
      %1400 = vst [vmem:[%s308 + $0x38] sm:$0xff] %v1392
      %v1401 = vadd.f32 %v1385, %v1386
      %v1402 = vadd.f32 %v1401, %v1387
      %v1403 = vadd.f32 %v1402, %v1388
      %v1404 = vadd.f32 %v1403, %v1389
      %v1405 = vadd.f32 %v1404, %v1390
      %v1406 = vadd.f32 %v1405, %v1391
      %v1407 = vadd.f32 %v1406, %v1392
      %v1408 = vrot.slane %v1407, 4
      %v1409 = vadd.f32 %v1407, %v1408
      %v1410 = vrot.slane %v1409, 2
      %v1411 = vadd.f32 %v1409, %v1410
      %v1412 = vrot.slane %v1411, 1
      %v1413 = vadd.f32 %v1411, %v1412
      %v1414 = vmul.f32 %v1385, %v1385
      %v1415 = vmul.f32 %v1386, %v1386
      %v1416 = vmul.f32 %v1387, %v1387
      %v1417 = vmul.f32 %v1388, %v1388
      %v1418 = vmul.f32 %v1389, %v1389
      %v1419 = vmul.f32 %v1390, %v1390
      %v1420 = vmul.f32 %v1391, %v1391
      %v1421 = vmul.f32 %v1392, %v1392
      %v1422 = vadd.f32 %v1414, %v1415
      %v1423 = vadd.f32 %v1422, %v1416
      %v1424 = vadd.f32 %v1423, %v1417
      %v1425 = vadd.f32 %v1424, %v1418
      %v1426 = vadd.f32 %v1425, %v1419
      %v1427 = vadd.f32 %v1426, %v1420
      %v1428 = vadd.f32 %v1427, %v1421
      %v1429 = vrot.slane %v1428, 4
      %v1430 = vadd.f32 %v1428, %v1429
      %v1431 = vrot.slane %v1430, 2
      %v1432 = vadd.f32 %v1430, %v1431
      %v1433 = vrot.slane %v1432, 1
      %v1434 = vadd.f32 %v1432, %v1433
      %vm1435 = vcmask 1040384
      %v1436 = vsel %vm1435, %v1413, %v1434
      %p1437 = scmp.eq.s32.totalorder %s20, 0
      %p1438 = scmp.eq.s32.totalorder %s21, 0
      %p1439 = pnand %p1437, %p1438
      %p1440 = pneg %p1439
      // Predicated region
      $region33: #{unet_encoder_block.2} parent=31 // pred_check
        _
      $region34: #{unet_encoder_block.2} parent=31 // pred_check_branch
        %1442 = sbr.rel (%p1439) target = $region36
      $region35: #{unet_encoder_block.2} parent=31 // pred_region
        %1443 = vst [vmem:[%s4] sm:$0x3] 0.0
      $region36: #{unet_encoder_block.2} parent=31 // pred_fallthru
        _
      %v1444 = vld [vmem:[%s4] sm:$0x3]
      %v1445 = vadd.f32 %v1444, %v1436
      %1446 = vst [vmem:[%s4] sm:$0x3] %v1445
      %s1447 = sadd.s32 %s20, %s21
      %p1448 = scmp.lt.s32.totalorder %s1447, 1
      %s1449 = scalar_select %p1448, %s1447, 1
      %s1450 = smul.addr %s1449, 8
      %s1451 = smul.addr %s1450, 8
      %s1452 = scalar_lea.vmem %s3, %s1451
      // Predicated region
      $region37: #{unet_encoder_block.2} parent=31 // pred_check
        %p1453 = pneg %p129
      $region38: #{unet_encoder_block.2} parent=31 // pred_check_branch
        %1455 = sbr.rel (%p1453) target = $region40
      $region39: #{unet_encoder_block.2} parent=31 // pred_region
        %s1456 = sadd.s32 %s20, %s21
      $region40: #{unet_encoder_block.2} parent=31 // pred_fallthru
        _
      // Predicated region
      $region41: #{unet_encoder_block.2} parent=31 // pred_check
        %p1457 = pneg %p150
      $region42: #{unet_encoder_block.2} parent=31 // pred_check_branch
        %1459 = sbr.rel (%p1457) target = $region44
      $region43: #{unet_encoder_block.2} parent=31 // pred_region
        _
      $region44: #{unet_encoder_block.2} parent=31 // pred_fallthru
        _
      // Predicated region
      $region45: #{unet_encoder_block.2} parent=31 // pred_check
        %p1460 = pneg %p150
      $region46: #{unet_encoder_block.2} parent=31 // pred_check_branch
        %1462 = sbr.rel (%p1460) target = $region48
      $region47: #{unet_encoder_block.2} parent=31 // pred_region
        _
      $region48: #{unet_encoder_block.2} parent=31 // pred_fallthru
        _
    $region32: #{unet_encoder_block.2} parent=5 // pred_fallthru
      _
    %p1463 = scmp.le.s32.totalorder 2, %s11
    // Predicated region
    $region49: #{unet_encoder_block.2} parent=5 // pred_check
      %p1464 = pneg %p1463
    $region50: #{unet_encoder_block.2} parent=5 // pred_check_branch
      %1466 = sbr.rel (%p1464) target = $region52
    $region51: #{unet_encoder_block.2} parent=5 // pred_region
      %s1467 = ssub.s32 %s11, 2
      // Predicated region
      $region53: #{unet_encoder_block.2} parent=51 // pred_check
        %p1468 = pneg %p135
      $region54: #{unet_encoder_block.2} parent=51 // pred_check_branch
        %1470 = sbr.rel (%p1468) target = $region56
      $region55: #{unet_encoder_block.2} parent=51 // pred_region
        %s1471 = sadd.s32 %s22, %s23
        %p1472 = scmp.lt.s32.totalorder %s1471, 1
        %s1473 = scalar_select %p1472, %s1471, 1
        %s1474 = smul.addr %s1473, 8
        %s1475 = smul.addr %s1474, 8
        %s1476 = scalar_lea.vmem %s3, %s1475
      $region56: #{unet_encoder_block.2} parent=51 // pred_fallthru
        _
    $region52: #{unet_encoder_block.2} parent=5 // pred_fallthru
      _
  $region6: #{unet_encoder_block.2} parent=0 // loop_footer
    %s15 = sadd.s32 1, %s11
  $region7: #{unet_encoder_block.2} parent=0 // loop_footer_branch
    %10 = sbr.rel target = $region3
  $region8: #{unet_encoder_block.2} parent=0 // loop_exit
    _

</llo_original>
